<compile_context>
chip_gen: v6e
topology: v6e:2x2x1
jax: 0.10.0
libtpu: 0.0.40
codegen_flags: <defaults>
</compile_context>

<pallas_src>
import jax
import jax.numpy as jnp
import numpy as np
from jax.experimental import pallas as pl
from jax.experimental.pallas import tpu as pltpu

_VMEM_LIMIT = 48 * 1024 * 1024   # fits v7x (64 MiB phys), lifts 16/32 MiB defaults


def _round_up(x, m):
    return (x + m - 1) // m * m


def _invariant_spec(block_shape, index_map):
    """BlockSpec for a grid-invariant operand; single-buffered when supported."""
    try:
        return pl.BlockSpec(block_shape, index_map, pipeline_mode=pl.Buffered(1))
    except Exception:  # older JAX without pipeline_mode: default double-buffering
        return pl.BlockSpec(block_shape, index_map)


# ---------------------------------------------------------------------------
# Matmul (+ bias) kernel: used for the one-time gate-table build and for the
# hoisted vocab projection.  Both grid axes "parallel" (megacore friendly),
# lane-dense output (N padded to 128 multiples).  K kept whole per block.
# ---------------------------------------------------------------------------
def _matmul_bias_kernel(a_ref, b_ref, bias_ref, o_ref):
    acc = jnp.dot(a_ref[...], b_ref[...], preferred_element_type=jnp.float32)
    o_ref[...] = (acc + bias_ref[...]).astype(o_ref.dtype)


def matmul_bias(a, b, bias, *, out_dtype=jnp.float32, max_tm=512, max_tn=1024):
    M, K = a.shape
    Kb, N = b.shape
    assert K == Kb and bias.shape == (1, N)
    assert max_tm % 8 == 0 and max_tn % 128 == 0
    # Pick large tiles and pad M/N up to them (review fix: never shrink the
    # tile to make it divide an awkward M — padding wastes at most one tile).
    tm = min(max_tm, _round_up(M, 8))
    tn = min(max_tn, _round_up(N, 128))
    Mp = _round_up(M, tm)
    Np = _round_up(N, tn)
    if Mp != M:
        a = jnp.pad(a, ((0, Mp - M), (0, 0)))
    if Np != N:
        b = jnp.pad(b, ((0, 0), (0, Np - N)))
        bias = jnp.pad(bias, ((0, 0), (0, Np - N)))
    out = pl.pallas_call(
        _matmul_bias_kernel,
        out_shape=jax.ShapeDtypeStruct((Mp, Np), out_dtype),
        grid_spec=pltpu.PrefetchScalarGridSpec(
            num_scalar_prefetch=0,
            grid=(Mp // tm, Np // tn),
            in_specs=[
                pl.BlockSpec((tm, K), lambda i, j: (i, 0)),
                pl.BlockSpec((K, tn), lambda i, j: (0, j)),
                pl.BlockSpec((1, tn), lambda i, j: (0, j)),
            ],
            out_specs=pl.BlockSpec((tm, tn), lambda i, j: (i, j)),
        ),
        compiler_params=pltpu.CompilerParams(
            dimension_semantics=("parallel", "parallel"),
            vmem_limit_bytes=_VMEM_LIMIT),
    )(a, b, bias)
    return out[:M, :N]


# ---------------------------------------------------------------------------
# Stage B: sequential GRU recurrence, chunk_t timesteps per grid step.
# Grid = (batch blocks "parallel", time chunks "arbitrary").
# VMEM budget per core (v7x check): 2*(chunk_t*tb*3Hp*2B) gx + 2*(chunk_t*tb*Hp*2B)
# h_all + 1*(Hp*3Hp*2B) whh + (tb*Hp*4B) scratch  — well under 48 MiB for
# chunk_t<=32, tb<=256, Hp<=1024.
# ---------------------------------------------------------------------------
def _gru_chunk_kernel(gx_ref, whh_ref, bhn_ref, h_ref, h_scr):
    """One grid step == chunk_t timesteps of the GRU recurrence.

    gx_ref : (TT, tb, 3*Hp) bf16  gathered gate-table rows (r|z|n, biases folded)
    whh_ref: (Hp, 3*Hp)     bf16  fused hidden->gate weights (r|z|n)
    bhn_ref: (1, Hp)        f32   hidden bias of the n gate (inside r * (.))
    h_ref  : (TT, tb, Hp)   bf16  hidden state at every timestep (output)
    h_scr  : (tb, Hp)       f32   carried hidden state across time chunks
    """
    TT = gx_ref.shape[0]
    tb, Hp = h_scr.shape

    # Zero-init keyed on the TIME axis so the carry resets per batch block.
    @pl.when(pl.program_id(1) == 0)
    def _():
        h_scr[...] = jnp.zeros_like(h_scr)

    whh = whh_ref[...]                                    # hoisted weight load
    b_hn = jnp.broadcast_to(bhn_ref[...], (tb, Hp))       # hoisted broadcast

    def step(i, h):
        gx = gx_ref[i].astype(jnp.float32)                # (tb, 3*Hp)
        gh = jnp.dot(h.astype(whh.dtype), whh,            # fused 3-gate matmul
                     preferred_element_type=jnp.float32)
        r = jax.nn.sigmoid(gx[:, :Hp] + gh[:, :Hp])
        z = jax.nn.sigmoid(gx[:, Hp:2 * Hp] + gh[:, Hp:2 * Hp])
        n = jnp.tanh(gx[:, 2 * Hp:] + r * (gh[:, 2 * Hp:] + b_hn))
        h_new = (1.0 - z) * n + z * h                     # f32 elementwise
        h_ref[i] = h_new.astype(h_ref.dtype)              # bf16 stream out
        return h_new                                      # f32 carry

    h_scr[...] = jax.lax.fori_loop(0, TT, step, h_scr[...], unroll=True)


def gru_recurrence(gates_x, whh_cat, b_hn, *, chunk_t, tb,
                   out_dtype=jnp.bfloat16):
    Tp, Bp, G = gates_x.shape
    Hp = G // 3
    return pl.pallas_call(
        _gru_chunk_kernel,
        out_shape=jax.ShapeDtypeStruct((Tp, Bp, Hp), out_dtype),
        grid_spec=pltpu.PrefetchScalarGridSpec(
            num_scalar_prefetch=0,
            grid=(Bp // tb, Tp // chunk_t),
            in_specs=[
                pl.BlockSpec((chunk_t, tb, G), lambda b, t: (t, b, 0)),
                # grid-invariant weights: constant index_map, single-buffered
                _invariant_spec((Hp, G), lambda b, t: (0, 0)),
                _invariant_spec((1, Hp), lambda b, t: (0, 0)),
            ],
            out_specs=pl.BlockSpec((chunk_t, tb, Hp), lambda b, t: (t, b, 0)),
            scratch_shapes=[pltpu.VMEM((tb, Hp), jnp.float32)],
        ),
        compiler_params=pltpu.CompilerParams(
            dimension_semantics=("parallel", "arbitrary"),  # batch-split on v7x
            vmem_limit_bytes=_VMEM_LIMIT),
    )(gates_x, whh_cat, b_hn)


# ---------------------------------------------------------------------------
# Wrapper
# ---------------------------------------------------------------------------
def neural_lm_forward(inputs, params, *, chunk_t=16, compute_dtype=jnp.bfloat16):
    """inputs: (B, T) int32 token ids -> (B, T, 1, V) float32 logits."""
    emb_table, wih, whh, bih, bhh, wproj, bproj = params
    B, T = inputs.shape
    E = emb_table.shape[1]
    H = whh.shape[2]
    V = wproj.shape[1]

    Hp = _round_up(H, 128)        # lane-dense hidden
    Vp = _round_up(V, 128)        # lane-dense logits
    Bp = _round_up(B, 16)         # >=16 sublanes: bf16 packing, feeds the MXU
    Tp = _round_up(T, chunk_t)
    tb = min(Bp, 256)             # batch rows per Stage-B block
    Bp = _round_up(Bp, tb)

    def pad2(w, rows, cols):
        return jnp.pad(w, ((0, rows - w.shape[0]), (0, cols - w.shape[1])))

    # Fused / folded parameters (gate order r, z, n; each gate padded to Hp).
    wih_cat = jnp.concatenate([pad2(wih[g], E, Hp) for g in range(3)], axis=1)
    whh_cat = jnp.concatenate([pad2(whh[g], Hp, Hp) for g in range(3)], axis=1)
    b_r = pad2(bih[0] + bhh[0], 1, Hp)                   # b_ir + b_hr folded
    b_z = pad2(bih[1] + bhh[1], 1, Hp)                   # b_iz + b_hz folded
    b_n = pad2(bih[2], 1, Hp)                            # b_in only
    bias_cat = jnp.concatenate([b_r, b_z, b_n], axis=1).astype(jnp.float32)
    b_hn = pad2(bhh[2], 1, Hp).astype(jnp.float32)       # stays inside r*(...)
    wproj_p = pad2(wproj, Hp, Vp)
    bproj_p = pad2(bproj, 1, Vp).astype(jnp.float32)

    # 1+2) Folded embedding + input-gate precompute: a (V, 3*Hp) gate table
    #      built once (V*E*3H flops instead of T*B*E*3H), then a per-token
    #      row gather in time-major order (only the tiny int id matrix is
    #      transposed — the (T,B,E) embedding tensor is never materialized).
    gate_table = matmul_bias(emb_table.astype(compute_dtype),
                             wih_cat.astype(compute_dtype), bias_cat,
                             out_dtype=compute_dtype)        # (V, 3*Hp) bf16
    gates_x = jnp.take(gate_table, jnp.transpose(inputs), axis=0)  # (T,B,3Hp)
    gates_x = jnp.pad(gates_x, ((0, Tp - T), (0, Bp - B), (0, 0)))

    # 3) Sequential GRU recurrence (only the fused hidden-side matmul left);
    #    h_all streamed out in bf16, f32 carry kept in VMEM scratch.
    h_all = gru_recurrence(gates_x, whh_cat.astype(compute_dtype), b_hn,
                           chunk_t=chunk_t, tb=tb,
                           out_dtype=compute_dtype)          # (Tp, Bp, Hp) bf16

    # 4) Hoisted vocab projection, batch-major: reorder the small bf16 h
    #    tensor once so the big logits tensor is written directly in its final
    #    (B, T, V) layout — no post-kernel transpose of logits.
    h_bt = jnp.transpose(h_all, (1, 0, 2)).reshape(Bp * Tp, Hp)
    logits = matmul_bias(h_bt, wproj_p.astype(compute_dtype), bproj_p,
                         out_dtype=jnp.float32)              # (Bp*Tp, Vp)
    logits = logits.reshape(Bp, Tp, Vp)[:B, :T, :V]          # drop padding

    # (B, T, V) -> (B, T, 1, V)  (matches torch.stack(dim=1) of (B,1,V) steps)
    return logits[:, :, None, :]


# ---------------------------------------------------------------------------
# Pure-JAX reference (float32 lax.scan GRU) for correctness checking.
# ---------------------------------------------------------------------------
def reference_forward(inputs, params):
    emb_table, wih, whh, bih, bhh, wproj, bproj = params
    x = jnp.take(emb_table, inputs, axis=0)          # (B, T, E)
    x = jnp.transpose(x, (1, 0, 2))                  # (T, B, E)
    B = inputs.shape[0]
    H = whh.shape[2]

    def step(h, x_t):
        i_r = x_t @ wih[0] + bih[0]
        i_z = x_t @ wih[1] + bih[1]
        i_n = x_t @ wih[2] + bih[2]
        h_r = h @ whh[0] + bhh[0]
        h_z = h @ whh[1] + bhh[1]
        h_n = h @ whh[2] + bhh[2]
        r = jax.nn.sigmoid(i_r + h_r)
        z = jax.nn.sigmoid(i_z + h_z)
        n = jnp.tanh(i_n + r * h_n)
        h_new = (1.0 - z) * n + z * h
        return h_new, h_new @ wproj + bproj

    h0 = jnp.zeros((B, H), jnp.float32)
    _, logits = jax.lax.scan(step, h0, x)            # (T, B, V)
    return jnp.transpose(logits, (1, 0, 2))[:, :, None, :]


def make_params(key, vocab_size, embedding_size, hidden_size):
    """Deterministic synthetic parameters (shapes match the torch module)."""
    ks = jax.random.split(key, 7)
    bound = 1.0 / np.sqrt(hidden_size)
    emb_table = jax.random.normal(ks[0], (vocab_size, embedding_size), jnp.float32)
    wih = jax.random.uniform(ks[1], (3, embedding_size, hidden_size),
                             jnp.float32, -bound, bound)
    whh = jax.random.uniform(ks[2], (3, hidden_size, hidden_size),
                             jnp.float32, -bound, bound)
    bih = jax.random.uniform(ks[3], (3, 1, hidden_size), jnp.float32, -bound, bound)
    bhh = jax.random.uniform(ks[4], (3, 1, hidden_size), jnp.float32, -bound, bound)
    wproj = jax.random.uniform(ks[5], (hidden_size, vocab_size),
                               jnp.float32, -bound, bound)
    bproj = jax.random.uniform(ks[6], (1, vocab_size), jnp.float32, -bound, bound)
    return (emb_table, wih, whh, bih, bhh, wproj, bproj)


if __name__ == "__main__":
    # Small shapes consistent with the module's forward:
    # batch=2, max_len=8, embedding=16, hidden=32, vocab=27
    B, T, E, H, V = 2, 8, 16, 32, 27
    INIT_TOKEN, EOS_TOKEN = 0, 1  # unused by forward(), kept for parity

    key = jax.random.PRNGKey(0)
    k_tok, k_par = jax.random.split(key)
    inputs = jax.random.randint(k_tok, (B, T), 0, V, dtype=jnp.int32)
    params = make_params(k_par, V, E, H)

    # chunk_t=4 -> 2 time-chunks, exercising the cross-chunk hidden carry.
    fwd = jax.jit(lambda i, p: neural_lm_forward(i, p, chunk_t=4))
    out = jax.block_until_ready(fwd(inputs, params))
    assert out.shape == (B, T, 1, V), out.shape

    ref = jax.block_until_ready(reference_forward(inputs, params))
    # MXU operands and the gx / h_all streams are bf16 (f32 accumulation, f32
    # gate math and hidden carry), so compare against the full-f32 reference
    # at a bf16-appropriate tolerance.
    np.testing.assert_allclose(np.asarray(out), np.asarray(ref),
                               rtol=2e-2, atol=3e-2)

    print("KERNEL_OK")
</pallas_src>

<mosaic_0001>
module attributes {stable_mosaic.version = 11 : i64} {
  func.func @_matmul_bias_kernel(%arg0: i32, %arg1: i32, %arg2: memref<32x16xbf16, #tpu.memory_space<vmem>>, %arg3: memref<16x384xbf16, #tpu.memory_space<vmem>>, %arg4: memref<1x384xf32, #tpu.memory_space<vmem>>, %arg5: memref<32x384xbf16, #tpu.memory_space<vmem>>) attributes {dimension_semantics = [#tpu.dimension_semantics<parallel>, #tpu.dimension_semantics<parallel>], iteration_bounds = array<i64: 1, 1>, scalar_prefetch = 0 : i64, scratch_operands = 0 : i64, tpu.core_type = #tpu.core_type<tc>, window_params = [{transform_indices = @transform_0, window_bounds = array<i64: 32, 16>}, {transform_indices = @transform_1, window_bounds = array<i64: 16, 384>}, {transform_indices = @transform_2, window_bounds = array<i64: 1, 384>}, {transform_indices = @transform_3, window_bounds = array<i64: 32, 384>}]} {
    %c0 = arith.constant 0 : index
    %c0_0 = arith.constant 0 : index
    %0 = vector.load %arg2[%c0, %c0_0] : memref<32x16xbf16, #tpu.memory_space<vmem>>, vector<32x16xbf16>
    %c0_1 = arith.constant 0 : index
    %c0_2 = arith.constant 0 : index
    %1 = vector.load %arg3[%c0_1, %c0_2] : memref<16x384xbf16, #tpu.memory_space<vmem>>, vector<16x384xbf16>
    %cst = arith.constant dense<0.000000e+00> : vector<32x384xf32>
    %2 = tpu.matmul %0, %1, %cst {dimension_numbers = #tpu.dot_dimension_numbers<[1], [0], [0], [1], [0, 0, 1, 1], [], []>} : vector<32x16xbf16>, vector<16x384xbf16>, vector<32x384xf32> -> vector<32x384xf32>
    %c0_3 = arith.constant 0 : index
    %c0_4 = arith.constant 0 : index
    %3 = vector.load %arg4[%c0_3, %c0_4] : memref<1x384xf32, #tpu.memory_space<vmem>>, vector<1x384xf32>
    %4 = vector.broadcast %3 : vector<1x384xf32> to vector<32x384xf32>
    %5 = arith.addf %2, %4 : vector<32x384xf32>
    %6 = arith.truncf %5 : vector<32x384xf32> to vector<32x384xbf16>
    %c0_5 = arith.constant 0 : index
    %c0_6 = arith.constant 0 : index
    %7 = vector.load %arg5[%c0_5, %c0_6] : memref<32x384xbf16, #tpu.memory_space<vmem>>, vector<32x384xbf16>
    tpu.vector_store %arg5[%c0_5, %c0_6], %6 {strides = array<i32>} : memref<32x384xbf16, #tpu.memory_space<vmem>>, vector<32x384xbf16>,
    return
  }
  func.func @transform_0(%arg0: i32, %arg1: i32) -> (i32, i32) {
    %c0_i32 = arith.constant 0 : i32
    %c0_i32_0 = arith.constant 0 : i32
    return %arg0, %c0_i32 : i32, i32
  }
  func.func @transform_1(%arg0: i32, %arg1: i32) -> (i32, i32) {
    %c0_i32 = arith.constant 0 : i32
    %c0_i32_0 = arith.constant 0 : i32
    return %c0_i32, %arg1 : i32, i32
  }
  func.func @transform_2(%arg0: i32, %arg1: i32) -> (i32, i32) {
    %c0_i32 = arith.constant 0 : i32
    %c0_i32_0 = arith.constant 0 : i32
    return %c0_i32, %arg1 : i32, i32
  }
  func.func @transform_3(%arg0: i32, %arg1: i32) -> (i32, i32) {
    %c0_i32 = arith.constant 0 : i32
    return %arg0, %arg1 : i32, i32
  }
}

module attributes {stable_mosaic.version = 11 : i64} {
  func.func @_gru_chunk_kernel(%arg0: i32, %arg1: i32, %arg2: memref<4x16x384xbf16, #tpu.memory_space<vmem>>, %arg3: memref<128x384xbf16, #tpu.memory_space<vmem>>, %arg4: memref<1x128xf32, #tpu.memory_space<vmem>>, %arg5: memref<4x16x128xbf16, #tpu.memory_space<vmem>>, %arg6: memref<16x128xf32, #tpu.memory_space<vmem>>) attributes {dimension_semantics = [#tpu.dimension_semantics<parallel>, #tpu.dimension_semantics<arbitrary>], iteration_bounds = array<i64: 1, 2>, scalar_prefetch = 0 : i64, scratch_operands = 1 : i64, tpu.core_type = #tpu.core_type<tc>, window_params = [{transform_indices = @transform_0, window_bounds = array<i64: 4, 16, 384>}, {pipeline_mode = #tpu.pipeline_mode<synchronous>, transform_indices = @transform_1, window_bounds = array<i64: 128, 384>}, {pipeline_mode = #tpu.pipeline_mode<synchronous>, transform_indices = @transform_2, window_bounds = array<i64: 1, 128>}, {transform_indices = @transform_3, window_bounds = array<i64: 4, 16, 128>}]} {
    %c0_i32 = arith.constant 0 : i32
    %0 = arith.cmpi eq, %arg1, %c0_i32 : i32
    %1 = arith.extui %0 : i1 to i32
    %c0_i32_0 = arith.constant 0 : i32
    %2 = arith.cmpi ne, %1, %c0_i32_0 : i32
    scf.if %2 {
      %cst_40 = arith.constant 0.000000e+00 : f32
      %161 = vector.broadcast %cst_40 : f32 to vector<16x128xf32>
      %c0_41 = arith.constant 0 : index
      %c0_42 = arith.constant 0 : index
      %162 = vector.load %arg6[%c0_41, %c0_42] : memref<16x128xf32, #tpu.memory_space<vmem>>, vector<16x128xf32>
      tpu.vector_store %arg6[%c0_41, %c0_42], %161 {strides = array<i32>} : memref<16x128xf32, #tpu.memory_space<vmem>>, vector<16x128xf32>,
    } else {
    }
    %c0 = arith.constant 0 : index
    %c0_1 = arith.constant 0 : index
    %3 = vector.load %arg3[%c0, %c0_1] : memref<128x384xbf16, #tpu.memory_space<vmem>>, vector<128x384xbf16>
    %c0_2 = arith.constant 0 : index
    %c0_3 = arith.constant 0 : index
    %4 = vector.load %arg4[%c0_2, %c0_3] : memref<1x128xf32, #tpu.memory_space<vmem>>, vector<1x128xf32>
    %5 = vector.shape_cast %4 : vector<1x128xf32> to vector<1x128xf32>
    %6 = vector.broadcast %5 : vector<1x128xf32> to vector<16x128xf32>
    %c0_4 = arith.constant 0 : index
    %c0_5 = arith.constant 0 : index
    %7 = vector.load %arg6[%c0_4, %c0_5] : memref<16x128xf32, #tpu.memory_space<vmem>>, vector<16x128xf32>
    %c0_i32_6 = arith.constant 0 : i32
    %8 = arith.index_cast %c0_i32_6 : i32 to index
    %c0_7 = arith.constant 0 : index
    %c0_8 = arith.constant 0 : index
    %9 = vector.load %arg2[%8, %c0_7, %c0_8] : memref<4x16x384xbf16, #tpu.memory_space<vmem>>, vector<1x16x384xbf16>
    %10 = vector.shape_cast %9 : vector<1x16x384xbf16> to vector<16x384xbf16>
    %11 = arith.extf %10 : vector<16x384xbf16> to vector<16x384xf32>
    %12 = arith.truncf %7 : vector<16x128xf32> to vector<16x128xbf16>
    %cst = arith.constant dense<0.000000e+00> : vector<16x384xf32>
    %13 = tpu.matmul %12, %3, %cst {dimension_numbers = #tpu.dot_dimension_numbers<[1], [0], [0], [1], [0, 0, 1, 1], [], []>} : vector<16x128xbf16>, vector<128x384xbf16>, vector<16x384xf32> -> vector<16x384xf32>
    %14 = vector.extract_strided_slice %11 {offsets = [0, 0], sizes = [16, 128], strides = [1, 1]} : vector<16x384xf32> to vector<16x128xf32>
    %15 = vector.extract_strided_slice %13 {offsets = [0, 0], sizes = [16, 128], strides = [1, 1]} : vector<16x384xf32> to vector<16x128xf32>
    %16 = arith.addf %14, %15 : vector<16x128xf32>
    %17 = arith.negf %16 : vector<16x128xf32>
    %18 = math.exp %17 : vector<16x128xf32>
    %cst_9 = arith.constant 1.000000e+00 : f32
    %19 = vector.broadcast %cst_9 : f32 to vector<16x128xf32>
    %20 = arith.addf %19, %18 : vector<16x128xf32>
    %21 = arith.divf %19, %20 : vector<16x128xf32>
    %22 = vector.extract_strided_slice %11 {offsets = [0, 128], sizes = [16, 128], strides = [1, 1]} : vector<16x384xf32> to vector<16x128xf32>
    %23 = vector.extract_strided_slice %13 {offsets = [0, 128], sizes = [16, 128], strides = [1, 1]} : vector<16x384xf32> to vector<16x128xf32>
    %24 = arith.addf %22, %23 : vector<16x128xf32>
    %25 = arith.negf %24 : vector<16x128xf32>
    %26 = math.exp %25 : vector<16x128xf32>
    %cst_10 = arith.constant 1.000000e+00 : f32
    %27 = vector.broadcast %cst_10 : f32 to vector<16x128xf32>
    %28 = arith.addf %27, %26 : vector<16x128xf32>
    %29 = arith.divf %27, %28 : vector<16x128xf32>
    %30 = vector.extract_strided_slice %11 {offsets = [0, 256], sizes = [16, 128], strides = [1, 1]} : vector<16x384xf32> to vector<16x128xf32>
    %31 = vector.extract_strided_slice %13 {offsets = [0, 256], sizes = [16, 128], strides = [1, 1]} : vector<16x384xf32> to vector<16x128xf32>
    %32 = arith.addf %31, %6 : vector<16x128xf32>
    %33 = arith.mulf %21, %32 : vector<16x128xf32>
    %34 = arith.addf %30, %33 : vector<16x128xf32>
    %35 = math.tanh %34 : vector<16x128xf32>
    %cst_11 = arith.constant 1.000000e+00 : f32
    %36 = vector.broadcast %cst_11 : f32 to vector<16x128xf32>
    %37 = arith.subf %36, %29 : vector<16x128xf32>
    %38 = arith.mulf %37, %35 : vector<16x128xf32>
    %39 = arith.mulf %29, %7 : vector<16x128xf32>
    %40 = arith.addf %38, %39 : vector<16x128xf32>
    %41 = arith.truncf %40 : vector<16x128xf32> to vector<16x128xbf16>
    %42 = arith.index_cast %c0_i32_6 : i32 to index
    %c0_12 = arith.constant 0 : index
    %c0_13 = arith.constant 0 : index
    %43 = vector.load %arg5[%42, %c0_12, %c0_13] : memref<4x16x128xbf16, #tpu.memory_space<vmem>>, vector<1x16x128xbf16>
    %44 = vector.shape_cast %43 : vector<1x16x128xbf16> to vector<16x128xbf16>
    %45 = vector.shape_cast %41 : vector<16x128xbf16> to vector<1x16x128xbf16>
    tpu.vector_store %arg5[%42, %c0_12, %c0_13], %45 {strides = array<i32>} : memref<4x16x128xbf16, #tpu.memory_space<vmem>>, vector<1x16x128xbf16>,
    %c1_i32 = arith.constant 1 : i32
    %46 = arith.index_cast %c1_i32 : i32 to index
    %c0_14 = arith.constant 0 : index
    %c0_15 = arith.constant 0 : index
    %47 = vector.load %arg2[%46, %c0_14, %c0_15] : memref<4x16x384xbf16, #tpu.memory_space<vmem>>, vector<1x16x384xbf16>
    %48 = vector.shape_cast %47 : vector<1x16x384xbf16> to vector<16x384xbf16>
    %49 = arith.extf %48 : vector<16x384xbf16> to vector<16x384xf32>
    %50 = arith.truncf %40 : vector<16x128xf32> to vector<16x128xbf16>
    %cst_16 = arith.constant dense<0.000000e+00> : vector<16x384xf32>
    %51 = tpu.matmul %50, %3, %cst_16 {dimension_numbers = #tpu.dot_dimension_numbers<[1], [0], [0], [1], [0, 0, 1, 1], [], []>} : vector<16x128xbf16>, vector<128x384xbf16>, vector<16x384xf32> -> vector<16x384xf32>
    %52 = vector.extract_strided_slice %49 {offsets = [0, 0], sizes = [16, 128], strides = [1, 1]} : vector<16x384xf32> to vector<16x128xf32>
    %53 = vector.extract_strided_slice %51 {offsets = [0, 0], sizes = [16, 128], strides = [1, 1]} : vector<16x384xf32> to vector<16x128xf32>
    %54 = arith.addf %52, %53 : vector<16x128xf32>
    %55 = arith.negf %54 : vector<16x128xf32>
    %56 = math.exp %55 : vector<16x128xf32>
    %cst_17 = arith.constant 1.000000e+00 : f32
    %57 = vector.broadcast %cst_17 : f32 to vector<16x128xf32>
    %58 = arith.addf %57, %56 : vector<16x128xf32>
    %59 = arith.divf %57, %58 : vector<16x128xf32>
    %60 = vector.extract_strided_slice %49 {offsets = [0, 128], sizes = [16, 128], strides = [1, 1]} : vector<16x384xf32> to vector<16x128xf32>
    %61 = vector.extract_strided_slice %51 {offsets = [0, 128], sizes = [16, 128], strides = [1, 1]} : vector<16x384xf32> to vector<16x128xf32>
    %62 = arith.addf %60, %61 : vector<16x128xf32>
    %63 = arith.negf %62 : vector<16x128xf32>
    %64 = math.exp %63 : vector<16x128xf32>
    %cst_18 = arith.constant 1.000000e+00 : f32
    %65 = vector.broadcast %cst_18 : f32 to vector<16x128xf32>
    %66 = arith.addf %65, %64 : vector<16x128xf32>
    %67 = arith.divf %65, %66 : vector<16x128xf32>
    %68 = vector.extract_strided_slice %49 {offsets = [0, 256], sizes = [16, 128], strides = [1, 1]} : vector<16x384xf32> to vector<16x128xf32>
    %69 = vector.extract_strided_slice %51 {offsets = [0, 256], sizes = [16, 128], strides = [1, 1]} : vector<16x384xf32> to vector<16x128xf32>
    %70 = arith.addf %69, %6 : vector<16x128xf32>
    %71 = arith.mulf %59, %70 : vector<16x128xf32>
    %72 = arith.addf %68, %71 : vector<16x128xf32>
    %73 = math.tanh %72 : vector<16x128xf32>
    %cst_19 = arith.constant 1.000000e+00 : f32
    %74 = vector.broadcast %cst_19 : f32 to vector<16x128xf32>
    %75 = arith.subf %74, %67 : vector<16x128xf32>
    %76 = arith.mulf %75, %73 : vector<16x128xf32>
    %77 = arith.mulf %67, %40 : vector<16x128xf32>
    %78 = arith.addf %76, %77 : vector<16x128xf32>
    %79 = arith.truncf %78 : vector<16x128xf32> to vector<16x128xbf16>
    %80 = arith.index_cast %c1_i32 : i32 to index
    %c0_20 = arith.constant 0 : index
    %c0_21 = arith.constant 0 : index
    %81 = vector.load %arg5[%80, %c0_20, %c0_21] : memref<4x16x128xbf16, #tpu.memory_space<vmem>>, vector<1x16x128xbf16>
    %82 = vector.shape_cast %81 : vector<1x16x128xbf16> to vector<16x128xbf16>
    %83 = vector.shape_cast %79 : vector<16x128xbf16> to vector<1x16x128xbf16>
    tpu.vector_store %arg5[%80, %c0_20, %c0_21], %83 {strides = array<i32>} : memref<4x16x128xbf16, #tpu.memory_space<vmem>>, vector<1x16x128xbf16>,
    %c2_i32 = arith.constant 2 : i32
    %84 = arith.index_cast %c2_i32 : i32 to index
    %c0_22 = arith.constant 0 : index
    %c0_23 = arith.constant 0 : index
    %85 = vector.load %arg2[%84, %c0_22, %c0_23] : memref<4x16x384xbf16, #tpu.memory_space<vmem>>, vector<1x16x384xbf16>
    %86 = vector.shape_cast %85 : vector<1x16x384xbf16> to vector<16x384xbf16>
    %87 = arith.extf %86 : vector<16x384xbf16> to vector<16x384xf32>
    %88 = arith.truncf %78 : vector<16x128xf32> to vector<16x128xbf16>
    %cst_24 = arith.constant dense<0.000000e+00> : vector<16x384xf32>
    %89 = tpu.matmul %88, %3, %cst_24 {dimension_numbers = #tpu.dot_dimension_numbers<[1], [0], [0], [1], [0, 0, 1, 1], [], []>} : vector<16x128xbf16>, vector<128x384xbf16>, vector<16x384xf32> -> vector<16x384xf32>
    %90 = vector.extract_strided_slice %87 {offsets = [0, 0], sizes = [16, 128], strides = [1, 1]} : vector<16x384xf32> to vector<16x128xf32>
    %91 = vector.extract_strided_slice %89 {offsets = [0, 0], sizes = [16, 128], strides = [1, 1]} : vector<16x384xf32> to vector<16x128xf32>
    %92 = arith.addf %90, %91 : vector<16x128xf32>
    %93 = arith.negf %92 : vector<16x128xf32>
    %94 = math.exp %93 : vector<16x128xf32>
    %cst_25 = arith.constant 1.000000e+00 : f32
    %95 = vector.broadcast %cst_25 : f32 to vector<16x128xf32>
    %96 = arith.addf %95, %94 : vector<16x128xf32>
    %97 = arith.divf %95, %96 : vector<16x128xf32>
    %98 = vector.extract_strided_slice %87 {offsets = [0, 128], sizes = [16, 128], strides = [1, 1]} : vector<16x384xf32> to vector<16x128xf32>
    %99 = vector.extract_strided_slice %89 {offsets = [0, 128], sizes = [16, 128], strides = [1, 1]} : vector<16x384xf32> to vector<16x128xf32>
    %100 = arith.addf %98, %99 : vector<16x128xf32>
    %101 = arith.negf %100 : vector<16x128xf32>
    %102 = math.exp %101 : vector<16x128xf32>
    %cst_26 = arith.constant 1.000000e+00 : f32
    %103 = vector.broadcast %cst_26 : f32 to vector<16x128xf32>
    %104 = arith.addf %103, %102 : vector<16x128xf32>
    %105 = arith.divf %103, %104 : vector<16x128xf32>
    %106 = vector.extract_strided_slice %87 {offsets = [0, 256], sizes = [16, 128], strides = [1, 1]} : vector<16x384xf32> to vector<16x128xf32>
    %107 = vector.extract_strided_slice %89 {offsets = [0, 256], sizes = [16, 128], strides = [1, 1]} : vector<16x384xf32> to vector<16x128xf32>
    %108 = arith.addf %107, %6 : vector<16x128xf32>
    %109 = arith.mulf %97, %108 : vector<16x128xf32>
    %110 = arith.addf %106, %109 : vector<16x128xf32>
    %111 = math.tanh %110 : vector<16x128xf32>
    %cst_27 = arith.constant 1.000000e+00 : f32
    %112 = vector.broadcast %cst_27 : f32 to vector<16x128xf32>
    %113 = arith.subf %112, %105 : vector<16x128xf32>
    %114 = arith.mulf %113, %111 : vector<16x128xf32>
    %115 = arith.mulf %105, %78 : vector<16x128xf32>
    %116 = arith.addf %114, %115 : vector<16x128xf32>
    %117 = arith.truncf %116 : vector<16x128xf32> to vector<16x128xbf16>
    %118 = arith.index_cast %c2_i32 : i32 to index
    %c0_28 = arith.constant 0 : index
    %c0_29 = arith.constant 0 : index
    %119 = vector.load %arg5[%118, %c0_28, %c0_29] : memref<4x16x128xbf16, #tpu.memory_space<vmem>>, vector<1x16x128xbf16>
    %120 = vector.shape_cast %119 : vector<1x16x128xbf16> to vector<16x128xbf16>
    %121 = vector.shape_cast %117 : vector<16x128xbf16> to vector<1x16x128xbf16>
    tpu.vector_store %arg5[%118, %c0_28, %c0_29], %121 {strides = array<i32>} : memref<4x16x128xbf16, #tpu.memory_space<vmem>>, vector<1x16x128xbf16>,
    %c3_i32 = arith.constant 3 : i32
    %122 = arith.index_cast %c3_i32 : i32 to index
    %c0_30 = arith.constant 0 : index
    %c0_31 = arith.constant 0 : index
    %123 = vector.load %arg2[%122, %c0_30, %c0_31] : memref<4x16x384xbf16, #tpu.memory_space<vmem>>, vector<1x16x384xbf16>
    %124 = vector.shape_cast %123 : vector<1x16x384xbf16> to vector<16x384xbf16>
    %125 = arith.extf %124 : vector<16x384xbf16> to vector<16x384xf32>
    %126 = arith.truncf %116 : vector<16x128xf32> to vector<16x128xbf16>
    %cst_32 = arith.constant dense<0.000000e+00> : vector<16x384xf32>
    %127 = tpu.matmul %126, %3, %cst_32 {dimension_numbers = #tpu.dot_dimension_numbers<[1], [0], [0], [1], [0, 0, 1, 1], [], []>} : vector<16x128xbf16>, vector<128x384xbf16>, vector<16x384xf32> -> vector<16x384xf32>
    %128 = vector.extract_strided_slice %125 {offsets = [0, 0], sizes = [16, 128], strides = [1, 1]} : vector<16x384xf32> to vector<16x128xf32>
    %129 = vector.extract_strided_slice %127 {offsets = [0, 0], sizes = [16, 128], strides = [1, 1]} : vector<16x384xf32> to vector<16x128xf32>
    %130 = arith.addf %128, %129 : vector<16x128xf32>
    %131 = arith.negf %130 : vector<16x128xf32>
    %132 = math.exp %131 : vector<16x128xf32>
    %cst_33 = arith.constant 1.000000e+00 : f32
    %133 = vector.broadcast %cst_33 : f32 to vector<16x128xf32>
    %134 = arith.addf %133, %132 : vector<16x128xf32>
    %135 = arith.divf %133, %134 : vector<16x128xf32>
    %136 = vector.extract_strided_slice %125 {offsets = [0, 128], sizes = [16, 128], strides = [1, 1]} : vector<16x384xf32> to vector<16x128xf32>
    %137 = vector.extract_strided_slice %127 {offsets = [0, 128], sizes = [16, 128], strides = [1, 1]} : vector<16x384xf32> to vector<16x128xf32>
    %138 = arith.addf %136, %137 : vector<16x128xf32>
    %139 = arith.negf %138 : vector<16x128xf32>
    %140 = math.exp %139 : vector<16x128xf32>
    %cst_34 = arith.constant 1.000000e+00 : f32
    %141 = vector.broadcast %cst_34 : f32 to vector<16x128xf32>
    %142 = arith.addf %141, %140 : vector<16x128xf32>
    %143 = arith.divf %141, %142 : vector<16x128xf32>
    %144 = vector.extract_strided_slice %125 {offsets = [0, 256], sizes = [16, 128], strides = [1, 1]} : vector<16x384xf32> to vector<16x128xf32>
    %145 = vector.extract_strided_slice %127 {offsets = [0, 256], sizes = [16, 128], strides = [1, 1]} : vector<16x384xf32> to vector<16x128xf32>
    %146 = arith.addf %145, %6 : vector<16x128xf32>
    %147 = arith.mulf %135, %146 : vector<16x128xf32>
    %148 = arith.addf %144, %147 : vector<16x128xf32>
    %149 = math.tanh %148 : vector<16x128xf32>
    %cst_35 = arith.constant 1.000000e+00 : f32
    %150 = vector.broadcast %cst_35 : f32 to vector<16x128xf32>
    %151 = arith.subf %150, %143 : vector<16x128xf32>
    %152 = arith.mulf %151, %149 : vector<16x128xf32>
    %153 = arith.mulf %143, %116 : vector<16x128xf32>
    %154 = arith.addf %152, %153 : vector<16x128xf32>
    %155 = arith.truncf %154 : vector<16x128xf32> to vector<16x128xbf16>
    %156 = arith.index_cast %c3_i32 : i32 to index
    %c0_36 = arith.constant 0 : index
    %c0_37 = arith.constant 0 : index
    %157 = vector.load %arg5[%156, %c0_36, %c0_37] : memref<4x16x128xbf16, #tpu.memory_space<vmem>>, vector<1x16x128xbf16>
    %158 = vector.shape_cast %157 : vector<1x16x128xbf16> to vector<16x128xbf16>
    %159 = vector.shape_cast %155 : vector<16x128xbf16> to vector<1x16x128xbf16>
    tpu.vector_store %arg5[%156, %c0_36, %c0_37], %159 {strides = array<i32>} : memref<4x16x128xbf16, #tpu.memory_space<vmem>>, vector<1x16x128xbf16>,
    %c4_i32 = arith.constant 4 : i32
    %c0_38 = arith.constant 0 : index
    %c0_39 = arith.constant 0 : index
    %160 = vector.load %arg6[%c0_38, %c0_39] : memref<16x128xf32, #tpu.memory_space<vmem>>, vector<16x128xf32>
    tpu.vector_store %arg6[%c0_38, %c0_39], %154 {strides = array<i32>} : memref<16x128xf32, #tpu.memory_space<vmem>>, vector<16x128xf32>,
    return
  }
  func.func @transform_0(%arg0: i32, %arg1: i32) -> (i32, i32, i32) {
    %c0_i32 = arith.constant 0 : i32
    %c0_i32_0 = arith.constant 0 : i32
    return %arg1, %arg0, %c0_i32 : i32, i32, i32
  }
  func.func @transform_1(%arg0: i32, %arg1: i32) -> (i32, i32) {
    %c0_i32 = arith.constant 0 : i32
    %c0_i32_0 = arith.constant 0 : i32
    %c0_i32_1 = arith.constant 0 : i32
    return %c0_i32, %c0_i32_0 : i32, i32
  }
  func.func @transform_2(%arg0: i32, %arg1: i32) -> (i32, i32) {
    %c0_i32 = arith.constant 0 : i32
    %c0_i32_0 = arith.constant 0 : i32
    %c0_i32_1 = arith.constant 0 : i32
    return %c0_i32, %c0_i32_0 : i32, i32
  }
  func.func @transform_3(%arg0: i32, %arg1: i32) -> (i32, i32, i32) {
    %c0_i32 = arith.constant 0 : i32
    %c0_i32_0 = arith.constant 0 : i32
    return %arg1, %arg0, %c0_i32 : i32, i32, i32
  }
}

module attributes {stable_mosaic.version = 11 : i64} {
  func.func @_matmul_bias_kernel(%arg0: i32, %arg1: i32, %arg2: memref<128x128xbf16, #tpu.memory_space<vmem>>, %arg3: memref<128x128xbf16, #tpu.memory_space<vmem>>, %arg4: memref<1x128xf32, #tpu.memory_space<vmem>>, %arg5: memref<128x128xf32, #tpu.memory_space<vmem>>) attributes {dimension_semantics = [#tpu.dimension_semantics<parallel>, #tpu.dimension_semantics<parallel>], iteration_bounds = array<i64: 1, 1>, scalar_prefetch = 0 : i64, scratch_operands = 0 : i64, tpu.core_type = #tpu.core_type<tc>, window_params = [{transform_indices = @transform_0, window_bounds = array<i64: 128, 128>}, {transform_indices = @transform_1, window_bounds = array<i64: 128, 128>}, {transform_indices = @transform_2, window_bounds = array<i64: 1, 128>}, {transform_indices = @transform_3, window_bounds = array<i64: 128, 128>}]} {
    %c0 = arith.constant 0 : index
    %c0_0 = arith.constant 0 : index
    %0 = vector.load %arg2[%c0, %c0_0] : memref<128x128xbf16, #tpu.memory_space<vmem>>, vector<128x128xbf16>
    %c0_1 = arith.constant 0 : index
    %c0_2 = arith.constant 0 : index
    %1 = vector.load %arg3[%c0_1, %c0_2] : memref<128x128xbf16, #tpu.memory_space<vmem>>, vector<128x128xbf16>
    %cst = arith.constant dense<0.000000e+00> : vector<128x128xf32>
    %2 = tpu.matmul %0, %1, %cst {dimension_numbers = #tpu.dot_dimension_numbers<[1], [0], [0], [1], [0, 0, 1, 1], [], []>} : vector<128x128xbf16>, vector<128x128xbf16>, vector<128x128xf32> -> vector<128x128xf32>
    %c0_3 = arith.constant 0 : index
    %c0_4 = arith.constant 0 : index
    %3 = vector.load %arg4[%c0_3, %c0_4] : memref<1x128xf32, #tpu.memory_space<vmem>>, vector<1x128xf32>
    %4 = vector.broadcast %3 : vector<1x128xf32> to vector<128x128xf32>
    %5 = arith.addf %2, %4 : vector<128x128xf32>
    %c0_5 = arith.constant 0 : index
    %c0_6 = arith.constant 0 : index
    %6 = vector.load %arg5[%c0_5, %c0_6] : memref<128x128xf32, #tpu.memory_space<vmem>>, vector<128x128xf32>
    tpu.vector_store %arg5[%c0_5, %c0_6], %5 {strides = array<i32>} : memref<128x128xf32, #tpu.memory_space<vmem>>, vector<128x128xf32>,
    return
  }
  func.func @transform_0(%arg0: i32, %arg1: i32) -> (i32, i32) {
    %c0_i32 = arith.constant 0 : i32
    %c0_i32_0 = arith.constant 0 : i32
    return %arg0, %c0_i32 : i32, i32
  }
  func.func @transform_1(%arg0: i32, %arg1: i32) -> (i32, i32) {
    %c0_i32 = arith.constant 0 : i32
    %c0_i32_0 = arith.constant 0 : i32
    return %c0_i32, %arg1 : i32, i32
  }
  func.func @transform_2(%arg0: i32, %arg1: i32) -> (i32, i32) {
    %c0_i32 = arith.constant 0 : i32
    %c0_i32_0 = arith.constant 0 : i32
    return %c0_i32, %arg1 : i32, i32
  }
  func.func @transform_3(%arg0: i32, %arg1: i32) -> (i32, i32) {
    %c0_i32 = arith.constant 0 : i32
    return %arg0, %arg1 : i32, i32
  }
}

</mosaic_0001>

<llo_original>
// kernel: _lambda_.3
$region0: #{_lambda_.3}
  #allocation0 [shape = 'u32[]', space=smem, size = 0x4, offset = 0x4, fixed_abs, tag = 'smem constant byte address 0x4 - core index']
  #allocation1 [shape = 'u32[144,128]{1,0:T(1,128)}', space=vmem, size = 0x12000, scoped, tag = 'internal scratch']
  %s0 = inlined_call_operand.vmem [shape: bf16[32,16], index: 0, kind: input, shape index: {}]
  %s1 = inlined_call_operand.vmem [shape: bf16[16,384], index: 1, kind: input, shape index: {}]
  %s2 = inlined_call_operand.vmem [shape: f32[1,384], index: 2, kind: input, shape index: {}]
  %s3 = inlined_call_operand.vmem [shape: bf16[32,384], index: 3, kind: output, shape index: {}]
  %s4 = sld [smem:[#allocation0]]
  $region22: #{_lambda_.3} parent=0
    _
  %s6 = ssub.s32 1, %s4
  %s7 = scalar_select 0, %s6, %s4
  // Predicated region
  $region2: #{_lambda_.3} parent=0 // pred_check
    _
  $region3: #{_lambda_.3} parent=0 // pred_check_branch
    %9 = sbr.rel (0) target = $region5
  $region4: #{_lambda_.3} parent=0 // pred_region
    _
  $region5: #{_lambda_.3} parent=0 // pred_fallthru
    _
  // Predicated region
  $region6: #{_lambda_.3} parent=0 // pred_check
    _
  $region7: #{_lambda_.3} parent=0 // pred_check_branch
    %11 = sbr.rel (0) target = $region9
  $region8: #{_lambda_.3} parent=0 // pred_region
    _
  $region9: #{_lambda_.3} parent=0 // pred_fallthru
    _
  // Predicated region
  $region10: #{_lambda_.3} parent=0 // pred_check
    _
  $region11: #{_lambda_.3} parent=0 // pred_check_branch
    %13 = sbr.rel (0) target = $region13
  $region12: #{_lambda_.3} parent=0 // pred_region
    _
  $region13: #{_lambda_.3} parent=0 // pred_fallthru
    _
  %v15 = vld [vmem:[%s0] sm:$0xf]
  %v16 = vld [vmem:[%s0 + $0x4] sm:$0xf]
  %v17 = vld [vmem:[%s0 + $0x8] sm:$0xf]
  %v18 = vld [vmem:[%s0 + $0xc] sm:$0xf]
  %v19 = vld [vmem:[%s1] sm:$0xff]
  %v20 = vld [vmem:[%s1 + $0x8] sm:$0xf]
  %v21 = vld [vmem:[%s1 + $0xc] sm:$0xff]
  %v22 = vld [vmem:[%s1 + $0x14] sm:$0xf]
  %v23 = vld [vmem:[%s2] sm:$0x7]
  %v25 = vlaneseq
  %v26 = vshrl.u32 %v25, 7
  %v27 = vsub.s32 0, %v26
  %v28 = vrot.slane %v23, %v27
  %v29 = vlaneseq
  %v30 = vshrl.u32 %v29, 7
  %v31 = vsub.s32 1, %v30
  %v32 = vrot.slane %v23, %v31
  %v33 = vlaneseq
  %v34 = vshrl.u32 %v33, 7
  %v35 = vsub.s32 2, %v34
  %v36 = vrot.slane %v23, %v35
  %v44 = vunpack.c.l.b16 %v15
  %v45 = vunpack.c.l.b16 %v16
  %v46 = vunpack.c.l.b16 %v17
  %v47 = vunpack.c.l.b16 %v18
  %v48 = vpack.c.b16 %v45, %v44
  %v49 = vpack.c.b16 %v47, %v46
  %v54 = vunpack.c.l.b16 %v19
  %v55 = vunpack.c.h.b16 %v19
  %v56 = vunpack.c.l.b16 %v20
  %v57 = vunpack.c.l.b16 %v21
  %v58 = vunpack.c.h.b16 %v21
  %v59 = vunpack.c.l.b16 %v22
  %v60 = vpack.c.b16 %v57, %v54
  %v61 = vpack.c.b16 %v58, %v55
  %v62 = vpack.c.b16 %v59, %v56
  %vm66 = vcmask 130048
  %v68 = vsel %vm66, %v48, 0
  %v71 = vsel %vm66, %v49, 0
  %73 = vmatprep.subr.bf16.mxu0 0
  %74 = vmatpush1.bf16.msra.mxu0 0
  %75 = vmatprep.subr.bf16.mxu0 0
  %76 = vmatpush1.bf16.msra.mxu0 0
  %77 = vmatprep.subr.bf16.mxu0 0
  %78 = vmatpush1.bf16.msra.mxu0 0
  %79 = vmatprep.subr.bf16.mxu0 0
  %80 = vmatpush1.bf16.msra.mxu0 0
  %81 = vmatprep.subr.bf16.mxu0 0
  %82 = vmatpush1.bf16.msra.mxu0 0
  %83 = vmatprep.subr.bf16.mxu0 0
  %84 = vmatpush1.bf16.msra.mxu0 0
  %85 = vmatprep.subr.bf16.mxu0 0
  %86 = vmatpush1.bf16.msra.mxu0 0
  %87 = vmatprep.subr.bf16.mxu0 %v61
  %88 = vmatpush1.bf16.msra.mxu0 %v60
  %89 = vmatprep.subr.bf16.mxu0 0
  %90 = vmatpush2.bf16.msra.mxu0 0
  %91 = vmatprep.subr.bf16.mxu0 0
  %92 = vmatpush2.bf16.msra.mxu0 0
  %93 = vmatprep.subr.bf16.mxu0 0
  %94 = vmatpush2.bf16.msra.mxu0 0
  %95 = vmatprep.subr.bf16.mxu0 0
  %96 = vmatpush2.bf16.msra.mxu0 0
  %97 = vmatprep.subr.bf16.mxu0 0
  %98 = vmatpush2.bf16.msra.mxu0 0
  %99 = vmatprep.subr.bf16.mxu0 0
  %100 = vmatpush2.bf16.msra.mxu0 0
  %101 = vmatprep.subr.bf16.mxu0 0
  %102 = vmatpush2.bf16.msra.mxu0 0
  %103 = vmatprep.subr.bf16.mxu0 0
  %104 = vmatpush2.bf16.msra.mxu0 0
  %105 = vmatprep.mubr.bf16.mxu0 0
  %106 = vmatmul.mubr.bf16.gmra.mxu0 %v68
  %v107 = vpop.f32.mrf.mxu0
  %v108 = vadd.f32 %v28, %v107
  %v109 = vpop.f32.mrf.mxu0
  %v110 = vadd.f32 %v32, %v109
  %v111 = vpop.f32.mrf.mxu0
  %v112 = vadd.f32 %v28, %v111
  %v113 = vpop.f32.mrf.mxu0
  %v114 = vadd.f32 %v32, %v113
  %115 = vmatprep.mubr.bf16.mxu0 0
  %116 = vmatmul.mubr.bf16.gmra.mxu0 %v71
  %v117 = vpop.f32.mrf.mxu0
  %v118 = vadd.f32 %v28, %v117
  %v119 = vpop.f32.mrf.mxu0
  %v120 = vadd.f32 %v32, %v119
  %v121 = vpop.f32.mrf.mxu0
  %v122 = vadd.f32 %v28, %v121
  %v123 = vpop.f32.mrf.mxu0
  %v124 = vadd.f32 %v32, %v123
  %125 = vdwg.mxu0
  %126 = vmatprep.subr.bf16.mxu0 0
  %127 = vmatpush1.bf16.msra.mxu0 0
  %128 = vmatprep.subr.bf16.mxu0 0
  %129 = vmatpush1.bf16.msra.mxu0 0
  %130 = vmatprep.subr.bf16.mxu0 0
  %131 = vmatpush1.bf16.msra.mxu0 0
  %132 = vmatprep.subr.bf16.mxu0 0
  %133 = vmatpush1.bf16.msra.mxu0 0
  %134 = vmatprep.subr.bf16.mxu0 0
  %135 = vmatpush1.bf16.msra.mxu0 0
  %136 = vmatprep.subr.bf16.mxu0 0
  %137 = vmatpush1.bf16.msra.mxu0 0
  %138 = vmatprep.subr.bf16.mxu0 0
  %139 = vmatpush1.bf16.msra.mxu0 0
  %140 = vmatprep.subr.bf16.mxu0 0
  %141 = vmatpush1.bf16.msra.mxu0 %v62
  %142 = vmatprep.subr.bf16.mxu0 0
  %143 = vmatpush2.bf16.msra.mxu0 0
  %144 = vmatprep.subr.bf16.mxu0 0
  %145 = vmatpush2.bf16.msra.mxu0 0
  %146 = vmatprep.subr.bf16.mxu0 0
  %147 = vmatpush2.bf16.msra.mxu0 0
  %148 = vmatprep.subr.bf16.mxu0 0
  %149 = vmatpush2.bf16.msra.mxu0 0
  %150 = vmatprep.subr.bf16.mxu0 0
  %151 = vmatpush2.bf16.msra.mxu0 0
  %152 = vmatprep.subr.bf16.mxu0 0
  %153 = vmatpush2.bf16.msra.mxu0 0
  %154 = vmatprep.subr.bf16.mxu0 0
  %155 = vmatpush2.bf16.msra.mxu0 0
  %156 = vmatprep.subr.bf16.mxu0 0
  %157 = vmatpush2.bf16.msra.mxu0 0
  %158 = vmatprep.mubr.bf16.mxu0 0
  %159 = vmatmul.mubr.bf16.gmra.mxu0 %v68
  %v160 = vpop.f32.mrf.mxu0
  %v161 = vadd.f32 %v36, %v160
  %v162 = vpop.f32.mrf.mxu0
  %v163 = vpop.f32.mrf.mxu0
  %v164 = vadd.f32 %v36, %v163
  %v165 = vpop.f32.mrf.mxu0
  %166 = vmatprep.mubr.bf16.mxu0 0
  %167 = vmatmul.mubr.bf16.gmra.mxu0 %v71
  %v168 = vpop.f32.mrf.mxu0
  %v169 = vadd.f32 %v36, %v168
  %v170 = vpop.f32.mrf.mxu0
  %v171 = vpop.f32.mrf.mxu0
  %v172 = vadd.f32 %v36, %v171
  %v173 = vpop.f32.mrf.mxu0
  %174 = vdwg.mxu0
  %v175 = vpack.c.bf16 %v112, %v108
  %v176 = vpack.c.bf16 %v114, %v110
  %v177 = vpack.c.bf16 %v164, %v161
  %v178 = vpack.c.bf16 %v122, %v118
  %v179 = vpack.c.bf16 %v124, %v120
  %v180 = vpack.c.bf16 %v172, %v169
  %v187 = vunpack.c.l.b16 %v175
  %v188 = vunpack.c.l.b16 %v176
  %v189 = vunpack.c.l.b16 %v177
  %v190 = vunpack.c.h.b16 %v175
  %v191 = vunpack.c.h.b16 %v176
  %v192 = vunpack.c.h.b16 %v177
  %v193 = vunpack.c.l.b16 %v178
  %v194 = vunpack.c.l.b16 %v179
  %v195 = vunpack.c.l.b16 %v180
  %v196 = vunpack.c.h.b16 %v178
  %v197 = vunpack.c.h.b16 %v179
  %v198 = vunpack.c.h.b16 %v180
  %v199 = vpack.c.b16 %v188, %v187
  %v200 = vpack.c.b16 %v189, %v189
  %v201 = vpack.c.b16 %v191, %v190
  %v202 = vpack.c.b16 %v192, %v192
  %v203 = vpack.c.b16 %v194, %v193
  %v204 = vpack.c.b16 %v195, %v195
  %v205 = vpack.c.b16 %v197, %v196
  %v206 = vpack.c.b16 %v198, %v198
  %215 = vst [vmem:[%s3] sm:$0xff] %v199
  %216 = vst [vmem:[%s3 + $0x8] sm:$0xf] %v200
  %217 = vst [vmem:[%s3 + $0xc] sm:$0xff] %v201
  %218 = vst [vmem:[%s3 + $0x14] sm:$0xf] %v202
  %219 = vst [vmem:[%s3 + $0x18] sm:$0xff] %v203
  %220 = vst [vmem:[%s3 + $0x20] sm:$0xf] %v204
  %221 = vst [vmem:[%s3 + $0x24] sm:$0xff] %v205
  %222 = vst [vmem:[%s3 + $0x2c] sm:$0xf] %v206
  // Predicated region
  $region14: #{_lambda_.3} parent=0 // pred_check
    _
  $region15: #{_lambda_.3} parent=0 // pred_check_branch
    %224 = sbr.rel (0) target = $region17
  $region16: #{_lambda_.3} parent=0 // pred_region
    _
  $region17: #{_lambda_.3} parent=0 // pred_fallthru
    _
  // Predicated region
  $region18: #{_lambda_.3} parent=0 // pred_check
    _
  $region19: #{_lambda_.3} parent=0 // pred_check_branch
    %226 = sbr.rel (0) target = $region21
  $region20: #{_lambda_.3} parent=0 // pred_region
    _
  $region21: #{_lambda_.3} parent=0 // pred_fallthru
    _

// kernel: _lambda_.5
$region0: #{_lambda_.5}
  #allocation0 [shape = 'u32[]', space=smem, size = 0x4, offset = 0x4, fixed_abs, tag = 'smem constant byte address 0x4 - core index']
  #allocation1 [shape = 'u32[144,128]{1,0:T(1,128)}', space=vmem, size = 0x12000, scoped, tag = 'internal scratch']
  %s0 = inlined_call_operand.vmem [shape: bf16[128,128], index: 0, kind: input, shape index: {}]
  %s1 = inlined_call_operand.vmem [shape: bf16[128,128], index: 1, kind: input, shape index: {}]
  %s2 = inlined_call_operand.vmem [shape: f32[1,128], index: 2, kind: input, shape index: {}]
  %s3 = inlined_call_operand.vmem [shape: f32[128,128], index: 3, kind: output, shape index: {}]
  %s4 = sld [smem:[#allocation0]]
  $region22: #{_lambda_.5} parent=0
    _
  %s6 = ssub.s32 1, %s4
  %s7 = scalar_select 0, %s6, %s4
  // Predicated region
  $region2: #{_lambda_.5} parent=0 // pred_check
    _
  $region3: #{_lambda_.5} parent=0 // pred_check_branch
    %9 = sbr.rel (0) target = $region5
  $region4: #{_lambda_.5} parent=0 // pred_region
    _
  $region5: #{_lambda_.5} parent=0 // pred_fallthru
    _
  // Predicated region
  $region6: #{_lambda_.5} parent=0 // pred_check
    _
  $region7: #{_lambda_.5} parent=0 // pred_check_branch
    %11 = sbr.rel (0) target = $region9
  $region8: #{_lambda_.5} parent=0 // pred_region
    _
  $region9: #{_lambda_.5} parent=0 // pred_fallthru
    _
  // Predicated region
  $region10: #{_lambda_.5} parent=0 // pred_check
    _
  $region11: #{_lambda_.5} parent=0 // pred_check_branch
    %13 = sbr.rel (0) target = $region13
  $region12: #{_lambda_.5} parent=0 // pred_region
    _
  $region13: #{_lambda_.5} parent=0 // pred_fallthru
    _
  %v15 = vld [vmem:[%s0] sm:$0xf]
  %v16 = vld [vmem:[%s0 + $0x4] sm:$0xf]
  %v17 = vld [vmem:[%s0 + $0x8] sm:$0xf]
  %v18 = vld [vmem:[%s0 + $0xc] sm:$0xf]
  %v19 = vld [vmem:[%s0 + $0x10] sm:$0xf]
  %v20 = vld [vmem:[%s0 + $0x14] sm:$0xf]
  %v21 = vld [vmem:[%s0 + $0x18] sm:$0xf]
  %v22 = vld [vmem:[%s0 + $0x1c] sm:$0xf]
  %v23 = vld [vmem:[%s0 + $0x20] sm:$0xf]
  %v24 = vld [vmem:[%s0 + $0x24] sm:$0xf]
  %v25 = vld [vmem:[%s0 + $0x28] sm:$0xf]
  %v26 = vld [vmem:[%s0 + $0x2c] sm:$0xf]
  %v27 = vld [vmem:[%s0 + $0x30] sm:$0xf]
  %v28 = vld [vmem:[%s0 + $0x34] sm:$0xf]
  %v29 = vld [vmem:[%s0 + $0x38] sm:$0xf]
  %v30 = vld [vmem:[%s0 + $0x3c] sm:$0xf]
  %v31 = vld [vmem:[%s1] sm:$0xf]
  %v32 = vld [vmem:[%s1 + $0x4] sm:$0xf]
  %v33 = vld [vmem:[%s1 + $0x8] sm:$0xf]
  %v34 = vld [vmem:[%s1 + $0xc] sm:$0xf]
  %v35 = vld [vmem:[%s1 + $0x10] sm:$0xf]
  %v36 = vld [vmem:[%s1 + $0x14] sm:$0xf]
  %v37 = vld [vmem:[%s1 + $0x18] sm:$0xf]
  %v38 = vld [vmem:[%s1 + $0x1c] sm:$0xf]
  %v39 = vld [vmem:[%s1 + $0x20] sm:$0xf]
  %v40 = vld [vmem:[%s1 + $0x24] sm:$0xf]
  %v41 = vld [vmem:[%s1 + $0x28] sm:$0xf]
  %v42 = vld [vmem:[%s1 + $0x2c] sm:$0xf]
  %v43 = vld [vmem:[%s1 + $0x30] sm:$0xf]
  %v44 = vld [vmem:[%s1 + $0x34] sm:$0xf]
  %v45 = vld [vmem:[%s1 + $0x38] sm:$0xf]
  %v46 = vld [vmem:[%s1 + $0x3c] sm:$0xf]
  %v47 = vld [vmem:[%s2] sm:$0x1]
  %v49 = vlaneseq
  %v50 = vshrl.u32 %v49, 7
  %v51 = vsub.s32 0, %v50
  %v52 = vrot.slane %v47, %v51
  %v70 = vunpack.c.l.b16 %v15
  %v71 = vunpack.c.l.b16 %v16
  %v72 = vunpack.c.l.b16 %v17
  %v73 = vunpack.c.l.b16 %v18
  %v74 = vunpack.c.l.b16 %v19
  %v75 = vunpack.c.l.b16 %v20
  %v76 = vunpack.c.l.b16 %v21
  %v77 = vunpack.c.l.b16 %v22
  %v78 = vunpack.c.l.b16 %v23
  %v79 = vunpack.c.l.b16 %v24
  %v80 = vunpack.c.l.b16 %v25
  %v81 = vunpack.c.l.b16 %v26
  %v82 = vunpack.c.l.b16 %v27
  %v83 = vunpack.c.l.b16 %v28
  %v84 = vunpack.c.l.b16 %v29
  %v85 = vunpack.c.l.b16 %v30
  %v86 = vpack.c.b16 %v71, %v70
  %v87 = vpack.c.b16 %v73, %v72
  %v88 = vpack.c.b16 %v75, %v74
  %v89 = vpack.c.b16 %v77, %v76
  %v90 = vpack.c.b16 %v79, %v78
  %v91 = vpack.c.b16 %v81, %v80
  %v92 = vpack.c.b16 %v83, %v82
  %v93 = vpack.c.b16 %v85, %v84
  %v118 = vunpack.c.l.b16 %v31
  %v119 = vunpack.c.l.b16 %v32
  %v120 = vunpack.c.l.b16 %v33
  %v121 = vunpack.c.l.b16 %v34
  %v122 = vunpack.c.l.b16 %v35
  %v123 = vunpack.c.l.b16 %v36
  %v124 = vunpack.c.l.b16 %v37
  %v125 = vunpack.c.l.b16 %v38
  %v126 = vunpack.c.l.b16 %v39
  %v127 = vunpack.c.l.b16 %v40
  %v128 = vunpack.c.l.b16 %v41
  %v129 = vunpack.c.l.b16 %v42
  %v130 = vunpack.c.l.b16 %v43
  %v131 = vunpack.c.l.b16 %v44
  %v132 = vunpack.c.l.b16 %v45
  %v133 = vunpack.c.l.b16 %v46
  %v134 = vpack.c.b16 %v119, %v118
  %v135 = vpack.c.b16 %v121, %v120
  %v136 = vpack.c.b16 %v123, %v122
  %v137 = vpack.c.b16 %v125, %v124
  %v138 = vpack.c.b16 %v127, %v126
  %v139 = vpack.c.b16 %v129, %v128
  %v140 = vpack.c.b16 %v131, %v130
  %v141 = vpack.c.b16 %v133, %v132
  %150 = vmatprep.subr.bf16.mxu0 0
  %151 = vmatpush1.bf16.msra.mxu0 %v141
  %152 = vmatprep.subr.bf16.mxu0 0
  %153 = vmatpush1.bf16.msra.mxu0 %v140
  %154 = vmatprep.subr.bf16.mxu0 0
  %155 = vmatpush1.bf16.msra.mxu0 %v139
  %156 = vmatprep.subr.bf16.mxu0 0
  %157 = vmatpush1.bf16.msra.mxu0 %v138
  %158 = vmatprep.subr.bf16.mxu0 0
  %159 = vmatpush1.bf16.msra.mxu0 %v137
  %160 = vmatprep.subr.bf16.mxu0 0
  %161 = vmatpush1.bf16.msra.mxu0 %v136
  %162 = vmatprep.subr.bf16.mxu0 0
  %163 = vmatpush1.bf16.msra.mxu0 %v135
  %164 = vmatprep.subr.bf16.mxu0 0
  %165 = vmatpush1.bf16.msra.mxu0 %v134
  %166 = vmatprep.subr.bf16.mxu0 0
  %167 = vmatpush2.bf16.msra.mxu0 0
  %168 = vmatprep.subr.bf16.mxu0 0
  %169 = vmatpush2.bf16.msra.mxu0 0
  %170 = vmatprep.subr.bf16.mxu0 0
  %171 = vmatpush2.bf16.msra.mxu0 0
  %172 = vmatprep.subr.bf16.mxu0 0
  %173 = vmatpush2.bf16.msra.mxu0 0
  %174 = vmatprep.subr.bf16.mxu0 0
  %175 = vmatpush2.bf16.msra.mxu0 0
  %176 = vmatprep.subr.bf16.mxu0 0
  %177 = vmatpush2.bf16.msra.mxu0 0
  %178 = vmatprep.subr.bf16.mxu0 0
  %179 = vmatpush2.bf16.msra.mxu0 0
  %180 = vmatprep.subr.bf16.mxu0 0
  %181 = vmatpush2.bf16.msra.mxu0 0
  %182 = vmatprep.mubr.bf16.mxu0 0
  %183 = vmatmul.mubr.bf16.gmra.mxu0 %v86
  %v184 = vpop.f32.mrf.mxu0
  %v185 = vadd.f32 %v52, %v184
  %v186 = vpop.f32.mrf.mxu0
  %v187 = vpop.f32.mrf.mxu0
  %v188 = vadd.f32 %v52, %v187
  %v189 = vpop.f32.mrf.mxu0
  %190 = vmatprep.mubr.bf16.mxu0 0
  %191 = vmatmul.mubr.bf16.gmra.mxu0 %v87
  %v192 = vpop.f32.mrf.mxu0
  %v193 = vadd.f32 %v52, %v192
  %v194 = vpop.f32.mrf.mxu0
  %v195 = vpop.f32.mrf.mxu0
  %v196 = vadd.f32 %v52, %v195
  %v197 = vpop.f32.mrf.mxu0
  %198 = vmatprep.mubr.bf16.mxu0 0
  %199 = vmatmul.mubr.bf16.gmra.mxu0 %v88
  %v200 = vpop.f32.mrf.mxu0
  %v201 = vadd.f32 %v52, %v200
  %v202 = vpop.f32.mrf.mxu0
  %v203 = vpop.f32.mrf.mxu0
  %v204 = vadd.f32 %v52, %v203
  %v205 = vpop.f32.mrf.mxu0
  %206 = vmatprep.mubr.bf16.mxu0 0
  %207 = vmatmul.mubr.bf16.gmra.mxu0 %v89
  %v208 = vpop.f32.mrf.mxu0
  %v209 = vadd.f32 %v52, %v208
  %v210 = vpop.f32.mrf.mxu0
  %v211 = vpop.f32.mrf.mxu0
  %v212 = vadd.f32 %v52, %v211
  %v213 = vpop.f32.mrf.mxu0
  %214 = vmatprep.mubr.bf16.mxu0 0
  %215 = vmatmul.mubr.bf16.gmra.mxu0 %v90
  %v216 = vpop.f32.mrf.mxu0
  %v217 = vadd.f32 %v52, %v216
  %v218 = vpop.f32.mrf.mxu0
  %v219 = vpop.f32.mrf.mxu0
  %v220 = vadd.f32 %v52, %v219
  %v221 = vpop.f32.mrf.mxu0
  %222 = vmatprep.mubr.bf16.mxu0 0
  %223 = vmatmul.mubr.bf16.gmra.mxu0 %v91
  %v224 = vpop.f32.mrf.mxu0
  %v225 = vadd.f32 %v52, %v224
  %v226 = vpop.f32.mrf.mxu0
  %v227 = vpop.f32.mrf.mxu0
  %v228 = vadd.f32 %v52, %v227
  %v229 = vpop.f32.mrf.mxu0
  %230 = vmatprep.mubr.bf16.mxu0 0
  %231 = vmatmul.mubr.bf16.gmra.mxu0 %v92
  %v232 = vpop.f32.mrf.mxu0
  %v233 = vadd.f32 %v52, %v232
  %v234 = vpop.f32.mrf.mxu0
  %v235 = vpop.f32.mrf.mxu0
  %v236 = vadd.f32 %v52, %v235
  %v237 = vpop.f32.mrf.mxu0
  %238 = vmatprep.mubr.bf16.mxu0 0
  %239 = vmatmul.mubr.bf16.gmra.mxu0 %v93
  %v240 = vpop.f32.mrf.mxu0
  %v241 = vadd.f32 %v52, %v240
  %v242 = vpop.f32.mrf.mxu0
  %v243 = vpop.f32.mrf.mxu0
  %v244 = vadd.f32 %v52, %v243
  %v245 = vpop.f32.mrf.mxu0
  %246 = vdwg.mxu0
  %247 = vst [vmem:[%s3] sm:$0xff] %v185
  %248 = vst [vmem:[%s3 + $0x8] sm:$0xff] %v188
  %249 = vst [vmem:[%s3 + $0x10] sm:$0xff] %v193
  %250 = vst [vmem:[%s3 + $0x18] sm:$0xff] %v196
  %251 = vst [vmem:[%s3 + $0x20] sm:$0xff] %v201
  %252 = vst [vmem:[%s3 + $0x28] sm:$0xff] %v204
  %253 = vst [vmem:[%s3 + $0x30] sm:$0xff] %v209
  %254 = vst [vmem:[%s3 + $0x38] sm:$0xff] %v212
  %255 = vst [vmem:[%s3 + $0x40] sm:$0xff] %v217
  %256 = vst [vmem:[%s3 + $0x48] sm:$0xff] %v220
  %257 = vst [vmem:[%s3 + $0x50] sm:$0xff] %v225
  %258 = vst [vmem:[%s3 + $0x58] sm:$0xff] %v228
  %259 = vst [vmem:[%s3 + $0x60] sm:$0xff] %v233
  %260 = vst [vmem:[%s3 + $0x68] sm:$0xff] %v236
  %261 = vst [vmem:[%s3 + $0x70] sm:$0xff] %v241
  %262 = vst [vmem:[%s3 + $0x78] sm:$0xff] %v244
  // Predicated region
  $region14: #{_lambda_.5} parent=0 // pred_check
    _
  $region15: #{_lambda_.5} parent=0 // pred_check_branch
    %264 = sbr.rel (0) target = $region17
  $region16: #{_lambda_.5} parent=0 // pred_region
    _
  $region17: #{_lambda_.5} parent=0 // pred_fallthru
    _
  // Predicated region
  $region18: #{_lambda_.5} parent=0 // pred_check
    _
  $region19: #{_lambda_.5} parent=0 // pred_check_branch
    %266 = sbr.rel (0) target = $region21
  $region20: #{_lambda_.5} parent=0 // pred_region
    _
  $region21: #{_lambda_.5} parent=0 // pred_fallthru
    _

// kernel: _lambda_.4
$region0: #{_lambda_.4}
  #allocation0 [shape = 'u32[]', space=smem, size = 0x4, offset = 0x4, fixed_abs, tag = 'smem constant byte address 0x4 - core index']
  #allocation1 [shape = 'u32[144,128]{1,0:T(1,128)}', space=vmem, size = 0x12000, scoped, tag = 'internal scratch']
  #allocation2 [shape = 'f32[16,128]{1,0:T(8,128)}', space=vmem, size = 0x2000, scoped, tag = 'scratch operand']
  %s0 = inlined_call_operand.vmem [shape: bf16[8,16,384], index: 0, kind: input, shape index: {}]
  %s1 = inlined_call_operand.vmem [shape: bf16[128,384], index: 1, kind: input, shape index: {}]
  %s2 = inlined_call_operand.vmem [shape: f32[1,128], index: 2, kind: input, shape index: {}]
  %s3 = inlined_call_operand.vmem [shape: bf16[8,16,128], index: 3, kind: output, shape index: {}]
  %s4 = sld [smem:[#allocation0]]
  $region49: #{_lambda_.4} parent=0
    _
  %s6 = ssub.s32 1, %s4
  %s7 = scalar_select 0, %s6, %s4
  loop: start=0, step=1, limit=4
  $region2: #{_lambda_.4} parent=0 // loop_pre_header
    _
  $region3: #{_lambda_.4} parent=0 // loop_header
    %s9 = sphi 0, %s13
    %p10 = scmp.ge.s32.totalorder %s9, 4
    %s16 = sphi 0, %s28
    %s17 = sphi 0, %s24
    %s18 = sphi 0, %s16
    %s19 = sphi 0, %s17
    %s20 = sphi 0, %s18
    %s21 = sphi 0, %s19
    %s33 = sphi 0, %s35
    %s36 = sphi 0, %s33
    %s37 = sphi 0, %s36
    %s53 = sphi 0, %s37
    %s57 = sphi 0, %s57
    %s59 = sphi 0, %s57
    %s60 = sphi 0, %s59
    %s74 = sphi 0, %s60
    %s78 = sphi 0, %s78
    %s80 = sphi 0, %s78
    %s81 = sphi 0, %s80
    %s95 = sphi 0, %s81
    %s103 = sphi 0, %s105
    %s106 = sphi 0, %s103
    %s107 = sphi 0, %s106
    %s123 = sphi 0, %s107
  $region4: #{_lambda_.4} parent=0 // loop_header_branch
    %12 = sbr.rel (%p10) target = $region8
  $region5: #{_lambda_.4} parent=0 // loop_body
    %s14 = ssub.s32 %s9, 1
    %s15 = ssub.s32 %s9, 2
    %s22 = sadd.s32 1, %s17
    %p23 = scmp.ge.s32.totalorder %s22, 2
    %s24 = scalar_select %p23, 0, %s22
    %s25 = sadd.s32 1, %s16
    %s26 = scalar_select %p23, %s25, %s16
    %p27 = scmp.ge.s32.totalorder %s26, 1
    %s28 = scalar_select %p27, 0, %s26
    %s29 = ssub.s32 %s17, %s24
    %s30 = ssub.s32 %s16, %s28
    %s31 = sor.u32 %s29, %s30
    %p32 = scmp.eq.s32.totalorder %s31, 0
    %s34 = sadd.s32 %s33, 1
    %s35 = scalar_select %p32, %s33, %s34
    %p38 = pneg %p32
    %p39 = scmp.eq.s32.totalorder %s9, 1
    %p40 = por %p38, %p39
    %p41 = scmp.ne.s32.totalorder %s33, %s36
    %p42 = scmp.eq.s32.totalorder %s9, 0
    %p43 = por %p41, %p42
    %p44 = scmp.ne.s32.totalorder %s33, %s36
    %p45 = scmp.eq.s32.totalorder %s14, 1
    %p46 = por %p44, %p45
    %p47 = scmp.ne.s32.totalorder %s36, %s37
    %p48 = scmp.eq.s32.totalorder %s14, 0
    %p49 = por %p47, %p48
    %p50 = scmp.ne.s32.totalorder %s36, %s37
    %p51 = scmp.eq.s32.totalorder %s15, 1
    %p52 = por %p50, %p51
    %p54 = scmp.ne.s32.totalorder %s37, %s53
    %p55 = scmp.eq.s32.totalorder %s15, 0
    %p56 = por %p54, %p55
    %s58 = sadd.s32 %s57, 1
    %p61 = scmp.eq.s32.totalorder %s9, 1
    %p62 = scmp.ne.s32.totalorder %s57, %s59
    %p63 = scmp.eq.s32.totalorder %s9, 0
    %p64 = por %p62, %p63
    %p65 = scmp.ne.s32.totalorder %s57, %s59
    %p66 = scmp.eq.s32.totalorder %s14, 1
    %p67 = por %p65, %p66
    %p68 = scmp.ne.s32.totalorder %s59, %s60
    %p69 = scmp.eq.s32.totalorder %s14, 0
    %p70 = por %p68, %p69
    %p71 = scmp.ne.s32.totalorder %s59, %s60
    %p72 = scmp.eq.s32.totalorder %s15, 1
    %p73 = por %p71, %p72
    %p75 = scmp.ne.s32.totalorder %s60, %s74
    %p76 = scmp.eq.s32.totalorder %s15, 0
    %p77 = por %p75, %p76
    %s79 = sadd.s32 %s78, 1
    %p82 = scmp.eq.s32.totalorder %s9, 1
    %p83 = scmp.ne.s32.totalorder %s78, %s80
    %p84 = scmp.eq.s32.totalorder %s9, 0
    %p85 = por %p83, %p84
    %p86 = scmp.ne.s32.totalorder %s78, %s80
    %p87 = scmp.eq.s32.totalorder %s14, 1
    %p88 = por %p86, %p87
    %p89 = scmp.ne.s32.totalorder %s80, %s81
    %p90 = scmp.eq.s32.totalorder %s14, 0
    %p91 = por %p89, %p90
    %p92 = scmp.ne.s32.totalorder %s80, %s81
    %p93 = scmp.eq.s32.totalorder %s15, 1
    %p94 = por %p92, %p93
    %p96 = scmp.ne.s32.totalorder %s81, %s95
    %p97 = scmp.eq.s32.totalorder %s15, 0
    %p98 = por %p96, %p97
    %s99 = ssub.s32 %s17, %s24
    %s100 = ssub.s32 %s16, %s28
    %s101 = sor.u32 %s99, %s100
    %p102 = scmp.eq.s32.totalorder %s101, 0
    %s104 = sadd.s32 %s103, 1
    %s105 = scalar_select %p102, %s103, %s104
    %p108 = pneg %p102
    %p109 = scmp.eq.s32.totalorder %s9, 1
    %p110 = por %p108, %p109
    %p111 = scmp.ne.s32.totalorder %s103, %s106
    %p112 = scmp.eq.s32.totalorder %s9, 0
    %p113 = por %p111, %p112
    %p114 = scmp.ne.s32.totalorder %s103, %s106
    %p115 = scmp.eq.s32.totalorder %s14, 1
    %p116 = por %p114, %p115
    %p117 = scmp.ne.s32.totalorder %s106, %s107
    %p118 = scmp.eq.s32.totalorder %s14, 0
    %p119 = por %p117, %p118
    %p120 = scmp.ne.s32.totalorder %s106, %s107
    %p121 = scmp.eq.s32.totalorder %s15, 1
    %p122 = por %p120, %p121
    %p124 = scmp.ne.s32.totalorder %s107, %s123
    %p125 = scmp.eq.s32.totalorder %s15, 0
    %p126 = por %p124, %p125
    %p127 = scmp.le.s32.totalorder 1, %s9
    %p128 = scmp.lt.s32.totalorder %s9, 3
    %p129 = pnand %p127, %p128
    %p130 = pneg %p129
    // Predicated region
    $region9: #{_lambda_.4} parent=5 // pred_check
      _
    $region10: #{_lambda_.4} parent=5 // pred_check_branch
      %132 = sbr.rel (%p129) target = $region12
    $region11: #{_lambda_.4} parent=5 // pred_region
      %s133 = ssub.s32 %s9, 1
      // Predicated region
      $region13: #{_lambda_.4} parent=11 // pred_check
        %p134 = pneg %p70
      $region14: #{_lambda_.4} parent=11 // pred_check_branch
        %136 = sbr.rel (%p134) target = $region16
      $region15: #{_lambda_.4} parent=11 // pred_region
        _
      $region16: #{_lambda_.4} parent=11 // pred_fallthru
        _
      // Predicated region
      $region17: #{_lambda_.4} parent=11 // pred_check
        %p137 = pneg %p91
      $region18: #{_lambda_.4} parent=11 // pred_check_branch
        %139 = sbr.rel (%p137) target = $region20
      $region19: #{_lambda_.4} parent=11 // pred_region
        _
      $region20: #{_lambda_.4} parent=11 // pred_fallthru
        _
    $region12: #{_lambda_.4} parent=5 // pred_fallthru
      _
    %p140 = scmp.lt.s32.totalorder %s9, 2
    // Predicated region
    $region21: #{_lambda_.4} parent=5 // pred_check
      %p141 = pneg %p140
    $region22: #{_lambda_.4} parent=5 // pred_check_branch
      %143 = sbr.rel (%p141) target = $region24
    $region23: #{_lambda_.4} parent=5 // pred_region
      // Predicated region
      $region25: #{_lambda_.4} parent=23 // pred_check
        %p144 = pneg %p43
      $region26: #{_lambda_.4} parent=23 // pred_check_branch
        %146 = sbr.rel (%p144) target = $region28
      $region27: #{_lambda_.4} parent=23 // pred_region
        %s147 = smul.u32 4, %s17
        %s148 = smul.u32 2, %s16
        %p149 = scmp.lt.s32.totalorder %s147, 7
        %s150 = scalar_select %p149, %s147, 7
        %p151 = scmp.lt.s32.totalorder %s148, 1
        %s152 = scalar_select %p151, %s148, 1
        %s153 = smul.addr %s152, 3
        %s154 = smul.addr %s150, 6
        %s155 = sadd.s32 %s153, %s154
        %s156 = smul.addr %s155, 4
        %s157 = scalar_lea.vmem %s0, %s156
        %s158 = smul.u32 4, %s17
        %s159 = smul.u32 2, %s16
      $region28: #{_lambda_.4} parent=23 // pred_fallthru
        _
    $region24: #{_lambda_.4} parent=5 // pred_fallthru
      _
    %p160 = scmp.le.s32.totalorder 1, %s9
    %p161 = scmp.lt.s32.totalorder %s9, 3
    %p162 = pnand %p160, %p161
    %p163 = pneg %p162
    // Predicated region
    $region29: #{_lambda_.4} parent=5 // pred_check
      _
    $region30: #{_lambda_.4} parent=5 // pred_check_branch
      %165 = sbr.rel (%p162) target = $region32
    $region31: #{_lambda_.4} parent=5 // pred_region
      %s166 = ssub.s32 %s9, 1
      %s167 = smul.u32 4, %s19
      %s168 = smul.u32 2, %s18
      %p169 = scmp.lt.s32.totalorder %s167, 7
      %s170 = scalar_select %p169, %s167, 7
      %p171 = scmp.lt.s32.totalorder %s168, 1
      %s172 = scalar_select %p171, %s168, 1
      %s173 = smul.addr %s172, 3
      %s174 = smul.addr %s170, 6
      %s175 = sadd.s32 %s173, %s174
      %s176 = smul.addr %s175, 4
      %s177 = scalar_lea.vmem %s0, %s176
      %p178 = pneg %p49
      %p179 = pneg %p46
      %p180 = pneg %p70
      %p181 = pneg %p67
      %p182 = pneg %p91
      %p183 = pneg %p88
      %p184 = pneg %p119
      %p185 = pneg %p116
      %s186 = smul.u32 4, %s19
      %s187 = smul.u32 2, %s18
      %p188 = scmp.lt.s32.totalorder %s186, 7
      %s189 = scalar_select %p188, %s186, 7
      %p190 = scmp.lt.s32.totalorder %s187, 1
      %s191 = scalar_select %p190, %s187, 1
      %s192 = smul.addr %s189, 2
      %s193 = sadd.s32 %s191, %s192
      %s194 = smul.addr %s193, 4
      %s195 = scalar_lea.vmem %s3, %s194
      %s196 = smul.u32 4, %s19
      %s197 = smul.u32 2, %s18
      %p198 = scmp.lt.s32.totalorder %s196, 7
      %s199 = scalar_select %p198, %s196, 7
      %p200 = scmp.lt.s32.totalorder %s197, 1
      %s201 = scalar_select %p200, %s197, 1
      %s202 = smul.addr %s201, 3
      %s203 = smul.addr %s199, 6
      %s204 = sadd.s32 %s202, %s203
      %s205 = smul.addr %s204, 4
      %s206 = scalar_lea.vmem %s0, %s205
      %s207 = smul.u32 4, %s19
      %s208 = smul.u32 2, %s18
      %s209 = smul.u32 4, %s19
      %s210 = smul.u32 2, %s18
      %p211 = scmp.lt.s32.totalorder %s209, 7
      %s212 = scalar_select %p211, %s209, 7
      %p213 = scmp.lt.s32.totalorder %s210, 1
      %s214 = scalar_select %p213, %s210, 1
      %s215 = smul.addr %s212, 2
      %s216 = sadd.s32 %s214, %s215
      %s217 = smul.addr %s216, 4
      %s218 = scalar_lea.vmem %s3, %s217
      %s219 = smul.u32 4, %s19
      %s220 = smul.u32 2, %s18
      %p222 = scmp.eq.s32.totalorder %s19, 0
      // Predicated region
      $region33: #{_lambda_.4} parent=31 // pred_check
        %p223 = pneg %p222
      $region34: #{_lambda_.4} parent=31 // pred_check_branch
        %225 = sbr.rel (%p223) target = $region36
      $region35: #{_lambda_.4} parent=31 // pred_region
        %226 = vst [vmem:[#allocation2] sm:$0xff] 0.0
        %227 = vst [vmem:[#allocation2 + $0x8] sm:$0xff] 0.0
      $region36: #{_lambda_.4} parent=31 // pred_fallthru
        _
      %v228 = vld [vmem:[%s1] sm:$0xff]
      %v229 = vld [vmem:[%s1 + $0x8] sm:$0xf]
      %v230 = vld [vmem:[%s1 + $0xc] sm:$0xff]
      %v231 = vld [vmem:[%s1 + $0x14] sm:$0xf]
      %v232 = vld [vmem:[%s1 + $0x18] sm:$0xff]
      %v233 = vld [vmem:[%s1 + $0x20] sm:$0xf]
      %v234 = vld [vmem:[%s1 + $0x24] sm:$0xff]
      %v235 = vld [vmem:[%s1 + $0x2c] sm:$0xf]
      %v236 = vld [vmem:[%s1 + $0x30] sm:$0xff]
      %v237 = vld [vmem:[%s1 + $0x38] sm:$0xf]
      %v238 = vld [vmem:[%s1 + $0x3c] sm:$0xff]
      %v239 = vld [vmem:[%s1 + $0x44] sm:$0xf]
      %v240 = vld [vmem:[%s1 + $0x48] sm:$0xff]
      %v241 = vld [vmem:[%s1 + $0x50] sm:$0xf]
      %v242 = vld [vmem:[%s1 + $0x54] sm:$0xff]
      %v243 = vld [vmem:[%s1 + $0x5c] sm:$0xf]
      %v244 = vld [vmem:[%s1 + $0x60] sm:$0xff]
      %v245 = vld [vmem:[%s1 + $0x68] sm:$0xf]
      %v246 = vld [vmem:[%s1 + $0x6c] sm:$0xff]
      %v247 = vld [vmem:[%s1 + $0x74] sm:$0xf]
      %v248 = vld [vmem:[%s1 + $0x78] sm:$0xff]
      %v249 = vld [vmem:[%s1 + $0x80] sm:$0xf]
      %v250 = vld [vmem:[%s1 + $0x84] sm:$0xff]
      %v251 = vld [vmem:[%s1 + $0x8c] sm:$0xf]
      %v252 = vld [vmem:[%s1 + $0x90] sm:$0xff]
      %v253 = vld [vmem:[%s1 + $0x98] sm:$0xf]
      %v254 = vld [vmem:[%s1 + $0x9c] sm:$0xff]
      %v255 = vld [vmem:[%s1 + $0xa4] sm:$0xf]
      %v256 = vld [vmem:[%s1 + $0xa8] sm:$0xff]
      %v257 = vld [vmem:[%s1 + $0xb0] sm:$0xf]
      %v258 = vld [vmem:[%s1 + $0xb4] sm:$0xff]
      %v259 = vld [vmem:[%s1 + $0xbc] sm:$0xf]
      %v260 = vld [vmem:[%s2] sm:$0x1]
      %v262 = vlaneseq
      %v263 = vshrl.u32 %v262, 7
      %v264 = vsub.s32 0, %v263
      %v265 = vrot.slane %v260, %v264
      %v267 = vld [vmem:[#allocation2] sm:$0xff]
      %v268 = vld [vmem:[#allocation2 + $0x8] sm:$0xff]
      %v269 = vld [vmem:[%s206] sm:$0xff]
      %v270 = vld [vmem:[%s206 + $0x8] sm:$0xf]
      %v271 = vld [vmem:[%s206 + $0xc] sm:$0xff]
      %v272 = vld [vmem:[%s206 + $0x14] sm:$0xf]
      %v273 = vunpack.c.l.bf16 %v269
      %v274 = vunpack.c.h.bf16 %v269
      %v275 = vunpack.c.l.bf16 %v270
      %v276 = vunpack.c.l.bf16 %v271
      %v277 = vunpack.c.h.bf16 %v271
      %v278 = vunpack.c.l.bf16 %v272
      %v279 = vpack.c.bf16 %v268, %v267
      %v312 = vunpack.c.l.b16 %v228
      %v313 = vunpack.c.h.b16 %v228
      %v314 = vunpack.c.l.b16 %v229
      %v315 = vunpack.c.l.b16 %v230
      %v316 = vunpack.c.h.b16 %v230
      %v317 = vunpack.c.l.b16 %v231
      %v318 = vunpack.c.l.b16 %v232
      %v319 = vunpack.c.h.b16 %v232
      %v320 = vunpack.c.l.b16 %v233
      %v321 = vunpack.c.l.b16 %v234
      %v322 = vunpack.c.h.b16 %v234
      %v323 = vunpack.c.l.b16 %v235
      %v324 = vunpack.c.l.b16 %v236
      %v325 = vunpack.c.h.b16 %v236
      %v326 = vunpack.c.l.b16 %v237
      %v327 = vunpack.c.l.b16 %v238
      %v328 = vunpack.c.h.b16 %v238
      %v329 = vunpack.c.l.b16 %v239
      %v330 = vunpack.c.l.b16 %v240
      %v331 = vunpack.c.h.b16 %v240
      %v332 = vunpack.c.l.b16 %v241
      %v333 = vunpack.c.l.b16 %v242
      %v334 = vunpack.c.h.b16 %v242
      %v335 = vunpack.c.l.b16 %v243
      %v336 = vunpack.c.l.b16 %v244
      %v337 = vunpack.c.h.b16 %v244
      %v338 = vunpack.c.l.b16 %v245
      %v339 = vunpack.c.l.b16 %v246
      %v340 = vunpack.c.h.b16 %v246
      %v341 = vunpack.c.l.b16 %v247
      %v342 = vunpack.c.l.b16 %v248
      %v343 = vunpack.c.h.b16 %v248
      %v344 = vunpack.c.l.b16 %v249
      %v345 = vunpack.c.l.b16 %v250
      %v346 = vunpack.c.h.b16 %v250
      %v347 = vunpack.c.l.b16 %v251
      %v348 = vunpack.c.l.b16 %v252
      %v349 = vunpack.c.h.b16 %v252
      %v350 = vunpack.c.l.b16 %v253
      %v351 = vunpack.c.l.b16 %v254
      %v352 = vunpack.c.h.b16 %v254
      %v353 = vunpack.c.l.b16 %v255
      %v354 = vunpack.c.l.b16 %v256
      %v355 = vunpack.c.h.b16 %v256
      %v356 = vunpack.c.l.b16 %v257
      %v357 = vunpack.c.l.b16 %v258
      %v358 = vunpack.c.h.b16 %v258
      %v359 = vunpack.c.l.b16 %v259
      %v360 = vpack.c.b16 %v315, %v312
      %v361 = vpack.c.b16 %v316, %v313
      %v362 = vpack.c.b16 %v317, %v314
      %v363 = vpack.c.b16 %v321, %v318
      %v364 = vpack.c.b16 %v322, %v319
      %v365 = vpack.c.b16 %v323, %v320
      %v366 = vpack.c.b16 %v327, %v324
      %v367 = vpack.c.b16 %v328, %v325
      %v368 = vpack.c.b16 %v329, %v326
      %v369 = vpack.c.b16 %v333, %v330
      %v370 = vpack.c.b16 %v334, %v331
      %v371 = vpack.c.b16 %v335, %v332
      %v372 = vpack.c.b16 %v339, %v336
      %v373 = vpack.c.b16 %v340, %v337
      %v374 = vpack.c.b16 %v341, %v338
      %v375 = vpack.c.b16 %v345, %v342
      %v376 = vpack.c.b16 %v346, %v343
      %v377 = vpack.c.b16 %v347, %v344
      %v378 = vpack.c.b16 %v351, %v348
      %v379 = vpack.c.b16 %v352, %v349
      %v380 = vpack.c.b16 %v353, %v350
      %v381 = vpack.c.b16 %v357, %v354
      %v382 = vpack.c.b16 %v358, %v355
      %v383 = vpack.c.b16 %v359, %v356
      %408 = vmatprep.subr.bf16.mxu0 %v382
      %409 = vmatpush1.bf16.msra.mxu0 %v381
      %410 = vmatprep.subr.bf16.mxu0 %v379
      %411 = vmatpush1.bf16.msra.mxu0 %v378
      %412 = vmatprep.subr.bf16.mxu0 %v376
      %413 = vmatpush1.bf16.msra.mxu0 %v375
      %414 = vmatprep.subr.bf16.mxu0 %v373
      %415 = vmatpush1.bf16.msra.mxu0 %v372
      %416 = vmatprep.subr.bf16.mxu0 %v370
      %417 = vmatpush1.bf16.msra.mxu0 %v369
      %418 = vmatprep.subr.bf16.mxu0 %v367
      %419 = vmatpush1.bf16.msra.mxu0 %v366
      %420 = vmatprep.subr.bf16.mxu0 %v364
      %421 = vmatpush1.bf16.msra.mxu0 %v363
      %422 = vmatprep.subr.bf16.mxu0 %v361
      %423 = vmatpush1.bf16.msra.mxu0 %v360
      %424 = vmatprep.subr.bf16.mxu0 0
      %425 = vmatpush2.bf16.msra.mxu0 0
      %426 = vmatprep.subr.bf16.mxu0 0
      %427 = vmatpush2.bf16.msra.mxu0 0
      %428 = vmatprep.subr.bf16.mxu0 0
      %429 = vmatpush2.bf16.msra.mxu0 0
      %430 = vmatprep.subr.bf16.mxu0 0
      %431 = vmatpush2.bf16.msra.mxu0 0
      %432 = vmatprep.subr.bf16.mxu0 0
      %433 = vmatpush2.bf16.msra.mxu0 0
      %434 = vmatprep.subr.bf16.mxu0 0
      %435 = vmatpush2.bf16.msra.mxu0 0
      %436 = vmatprep.subr.bf16.mxu0 0
      %437 = vmatpush2.bf16.msra.mxu0 0
      %438 = vmatprep.subr.bf16.mxu0 0
      %439 = vmatpush2.bf16.msra.mxu0 0
      %440 = vmatprep.mubr.bf16.mxu0 0
      %441 = vmatmul.mubr.bf16.gmra.mxu0 %v279
      %v442 = vpop.f32.mrf.mxu0
      %v443 = vadd.f32 0.0, %v442
      %v444 = vpop.f32.mrf.mxu0
      %v445 = vadd.f32 0.0, %v444
      %v446 = vpop.f32.mrf.mxu0
      %v447 = vadd.f32 0.0, %v446
      %v448 = vpop.f32.mrf.mxu0
      %v449 = vadd.f32 0.0, %v448
      %450 = vdwg.mxu0
      %451 = vmatprep.subr.bf16.mxu0 0
      %452 = vmatpush1.bf16.msra.mxu0 %v383
      %453 = vmatprep.subr.bf16.mxu0 0
      %454 = vmatpush1.bf16.msra.mxu0 %v380
      %455 = vmatprep.subr.bf16.mxu0 0
      %456 = vmatpush1.bf16.msra.mxu0 %v377
      %457 = vmatprep.subr.bf16.mxu0 0
      %458 = vmatpush1.bf16.msra.mxu0 %v374
      %459 = vmatprep.subr.bf16.mxu0 0
      %460 = vmatpush1.bf16.msra.mxu0 %v371
      %461 = vmatprep.subr.bf16.mxu0 0
      %462 = vmatpush1.bf16.msra.mxu0 %v368
      %463 = vmatprep.subr.bf16.mxu0 0
      %464 = vmatpush1.bf16.msra.mxu0 %v365
      %465 = vmatprep.subr.bf16.mxu0 0
      %466 = vmatpush1.bf16.msra.mxu0 %v362
      %467 = vmatprep.subr.bf16.mxu0 0
      %468 = vmatpush2.bf16.msra.mxu0 0
      %469 = vmatprep.subr.bf16.mxu0 0
      %470 = vmatpush2.bf16.msra.mxu0 0
      %471 = vmatprep.subr.bf16.mxu0 0
      %472 = vmatpush2.bf16.msra.mxu0 0
      %473 = vmatprep.subr.bf16.mxu0 0
      %474 = vmatpush2.bf16.msra.mxu0 0
      %475 = vmatprep.subr.bf16.mxu0 0
      %476 = vmatpush2.bf16.msra.mxu0 0
      %477 = vmatprep.subr.bf16.mxu0 0
      %478 = vmatpush2.bf16.msra.mxu0 0
      %479 = vmatprep.subr.bf16.mxu0 0
      %480 = vmatpush2.bf16.msra.mxu0 0
      %481 = vmatprep.subr.bf16.mxu0 0
      %482 = vmatpush2.bf16.msra.mxu0 0
      %483 = vmatprep.mubr.bf16.mxu0 0
      %484 = vmatmul.mubr.bf16.gmra.mxu0 %v279
      %v485 = vpop.f32.mrf.mxu0
      %v486 = vadd.f32 0.0, %v485
      %v487 = vpop.f32.mrf.mxu0
      %v488 = vpop.f32.mrf.mxu0
      %v489 = vadd.f32 0.0, %v488
      %v490 = vpop.f32.mrf.mxu0
      %491 = vdwg.mxu0
      %v492 = vadd.f32 %v273, %v443
      %v493 = vadd.f32 %v276, %v447
      %v494 = vxor.u32 %v492, 2147483648
      %v495 = vxor.u32 %v493, 2147483648
      %v496 = vmul.f32 %v494, 1.442695
      %v497 = vpow.pop %v496
      %v498 = vmul.f32 %v495, 1.442695
      %v499 = vpow.pop %v498
      %v500 = vadd.f32 %v497, 1.0
      %v501 = vadd.f32 %v499, 1.0
      %v502 = vrcp.pop %v500
      %v503 = vmul.f32 1.0, %v502
      %v504 = vrcp.pop %v501
      %v505 = vmul.f32 1.0, %v504
      %v506 = vadd.f32 %v274, %v445
      %v507 = vadd.f32 %v277, %v449
      %v508 = vxor.u32 %v506, 2147483648
      %v509 = vxor.u32 %v507, 2147483648
      %v510 = vmul.f32 %v508, 1.442695
      %v511 = vpow.pop %v510
      %v512 = vmul.f32 %v509, 1.442695
      %v513 = vpow.pop %v512
      %v514 = vadd.f32 %v511, 1.0
      %v515 = vadd.f32 %v513, 1.0
      %v516 = vrcp.pop %v514
      %v517 = vmul.f32 1.0, %v516
      %v518 = vrcp.pop %v515
      %v519 = vmul.f32 1.0, %v518
      %v520 = vadd.f32 %v486, %v265
      %v521 = vadd.f32 %v489, %v265
      %v522 = vmul.f32 %v503, %v520
      %v523 = vmul.f32 %v505, %v521
      %v524 = vadd.f32 %v275, %v522
      %v525 = vadd.f32 %v278, %v523
      %v526 = vtanh.pop %v524
      %v527 = vtanh.pop %v525
      %v528 = vsub.f32 1.0, %v517
      %v529 = vsub.f32 1.0, %v519
      %v530 = vmul.f32 %v528, %v526
      %v531 = vmul.f32 %v529, %v527
      %v532 = vmul.f32 %v517, %v267
      %v533 = vmul.f32 %v519, %v268
      %v534 = vadd.f32 %v530, %v532
      %v535 = vadd.f32 %v531, %v533
      %v536 = vpack.c.bf16 %v535, %v534
      %v538 = vunpack.c.l.b16 %v536
      %v539 = vunpack.c.h.b16 %v536
      %v540 = vpack.c.b16 %v538, %v538
      %v541 = vpack.c.b16 %v539, %v539
      %544 = vst [vmem:[%s218] sm:$0xf] %v540
      %545 = vst [vmem:[%s218 + $0x4] sm:$0xf] %v541
      %s546 = scalar_lea.vmem %s206, 24
      %v547 = vld [vmem:[%s546] sm:$0xff]
      %v548 = vld [vmem:[%s546 + $0x8] sm:$0xf]
      %v549 = vld [vmem:[%s546 + $0xc] sm:$0xff]
      %v550 = vld [vmem:[%s546 + $0x14] sm:$0xf]
      %v551 = vunpack.c.l.bf16 %v547
      %v552 = vunpack.c.h.bf16 %v547
      %v553 = vunpack.c.l.bf16 %v548
      %v554 = vunpack.c.l.bf16 %v549
      %v555 = vunpack.c.h.bf16 %v549
      %v556 = vunpack.c.l.bf16 %v550
      %557 = vmatprep.subr.bf16.mxu0 %v382
      %558 = vmatpush1.bf16.msra.mxu0 %v381
      %559 = vmatprep.subr.bf16.mxu0 %v379
      %560 = vmatpush1.bf16.msra.mxu0 %v378
      %561 = vmatprep.subr.bf16.mxu0 %v376
      %562 = vmatpush1.bf16.msra.mxu0 %v375
      %563 = vmatprep.subr.bf16.mxu0 %v373
      %564 = vmatpush1.bf16.msra.mxu0 %v372
      %565 = vmatprep.subr.bf16.mxu0 %v370
      %566 = vmatpush1.bf16.msra.mxu0 %v369
      %567 = vmatprep.subr.bf16.mxu0 %v367
      %568 = vmatpush1.bf16.msra.mxu0 %v366
      %569 = vmatprep.subr.bf16.mxu0 %v364
      %570 = vmatpush1.bf16.msra.mxu0 %v363
      %571 = vmatprep.subr.bf16.mxu0 %v361
      %572 = vmatpush1.bf16.msra.mxu0 %v360
      %573 = vmatprep.subr.bf16.mxu0 0
      %574 = vmatpush2.bf16.msra.mxu0 0
      %575 = vmatprep.subr.bf16.mxu0 0
      %576 = vmatpush2.bf16.msra.mxu0 0
      %577 = vmatprep.subr.bf16.mxu0 0
      %578 = vmatpush2.bf16.msra.mxu0 0
      %579 = vmatprep.subr.bf16.mxu0 0
      %580 = vmatpush2.bf16.msra.mxu0 0
      %581 = vmatprep.subr.bf16.mxu0 0
      %582 = vmatpush2.bf16.msra.mxu0 0
      %583 = vmatprep.subr.bf16.mxu0 0
      %584 = vmatpush2.bf16.msra.mxu0 0
      %585 = vmatprep.subr.bf16.mxu0 0
      %586 = vmatpush2.bf16.msra.mxu0 0
      %587 = vmatprep.subr.bf16.mxu0 0
      %588 = vmatpush2.bf16.msra.mxu0 0
      %589 = vmatprep.mubr.bf16.mxu0 0
      %590 = vmatmul.mubr.bf16.gmra.mxu0 %v536
      %v591 = vpop.f32.mrf.mxu0
      %v592 = vadd.f32 0.0, %v591
      %v593 = vpop.f32.mrf.mxu0
      %v594 = vadd.f32 0.0, %v593
      %v595 = vpop.f32.mrf.mxu0
      %v596 = vadd.f32 0.0, %v595
      %v597 = vpop.f32.mrf.mxu0
      %v598 = vadd.f32 0.0, %v597
      %599 = vdwg.mxu0
      %600 = vmatprep.subr.bf16.mxu0 0
      %601 = vmatpush1.bf16.msra.mxu0 %v383
      %602 = vmatprep.subr.bf16.mxu0 0
      %603 = vmatpush1.bf16.msra.mxu0 %v380
      %604 = vmatprep.subr.bf16.mxu0 0
      %605 = vmatpush1.bf16.msra.mxu0 %v377
      %606 = vmatprep.subr.bf16.mxu0 0
      %607 = vmatpush1.bf16.msra.mxu0 %v374
      %608 = vmatprep.subr.bf16.mxu0 0
      %609 = vmatpush1.bf16.msra.mxu0 %v371
      %610 = vmatprep.subr.bf16.mxu0 0
      %611 = vmatpush1.bf16.msra.mxu0 %v368
      %612 = vmatprep.subr.bf16.mxu0 0
      %613 = vmatpush1.bf16.msra.mxu0 %v365
      %614 = vmatprep.subr.bf16.mxu0 0
      %615 = vmatpush1.bf16.msra.mxu0 %v362
      %616 = vmatprep.subr.bf16.mxu0 0
      %617 = vmatpush2.bf16.msra.mxu0 0
      %618 = vmatprep.subr.bf16.mxu0 0
      %619 = vmatpush2.bf16.msra.mxu0 0
      %620 = vmatprep.subr.bf16.mxu0 0
      %621 = vmatpush2.bf16.msra.mxu0 0
      %622 = vmatprep.subr.bf16.mxu0 0
      %623 = vmatpush2.bf16.msra.mxu0 0
      %624 = vmatprep.subr.bf16.mxu0 0
      %625 = vmatpush2.bf16.msra.mxu0 0
      %626 = vmatprep.subr.bf16.mxu0 0
      %627 = vmatpush2.bf16.msra.mxu0 0
      %628 = vmatprep.subr.bf16.mxu0 0
      %629 = vmatpush2.bf16.msra.mxu0 0
      %630 = vmatprep.subr.bf16.mxu0 0
      %631 = vmatpush2.bf16.msra.mxu0 0
      %632 = vmatprep.mubr.bf16.mxu0 0
      %633 = vmatmul.mubr.bf16.gmra.mxu0 %v536
      %v634 = vpop.f32.mrf.mxu0
      %v635 = vadd.f32 0.0, %v634
      %v636 = vpop.f32.mrf.mxu0
      %v637 = vpop.f32.mrf.mxu0
      %v638 = vadd.f32 0.0, %v637
      %v639 = vpop.f32.mrf.mxu0
      %640 = vdwg.mxu0
      %v641 = vadd.f32 %v551, %v592
      %v642 = vadd.f32 %v554, %v596
      %v643 = vxor.u32 %v641, 2147483648
      %v644 = vxor.u32 %v642, 2147483648
      %v645 = vmul.f32 %v643, 1.442695
      %v646 = vpow.pop %v645
      %v647 = vmul.f32 %v644, 1.442695
      %v648 = vpow.pop %v647
      %v649 = vadd.f32 %v646, 1.0
      %v650 = vadd.f32 %v648, 1.0
      %v651 = vrcp.pop %v649
      %v652 = vmul.f32 1.0, %v651
      %v653 = vrcp.pop %v650
      %v654 = vmul.f32 1.0, %v653
      %v655 = vadd.f32 %v552, %v594
      %v656 = vadd.f32 %v555, %v598
      %v657 = vxor.u32 %v655, 2147483648
      %v658 = vxor.u32 %v656, 2147483648
      %v659 = vmul.f32 %v657, 1.442695
      %v660 = vpow.pop %v659
      %v661 = vmul.f32 %v658, 1.442695
      %v662 = vpow.pop %v661
      %v663 = vadd.f32 %v660, 1.0
      %v664 = vadd.f32 %v662, 1.0
      %v665 = vrcp.pop %v663
      %v666 = vmul.f32 1.0, %v665
      %v667 = vrcp.pop %v664
      %v668 = vmul.f32 1.0, %v667
      %v669 = vadd.f32 %v635, %v265
      %v670 = vadd.f32 %v638, %v265
      %v671 = vmul.f32 %v652, %v669
      %v672 = vmul.f32 %v654, %v670
      %v673 = vadd.f32 %v553, %v671
      %v674 = vadd.f32 %v556, %v672
      %v675 = vtanh.pop %v673
      %v676 = vtanh.pop %v674
      %v677 = vsub.f32 1.0, %v666
      %v678 = vsub.f32 1.0, %v668
      %v679 = vmul.f32 %v677, %v675
      %v680 = vmul.f32 %v678, %v676
      %v681 = vmul.f32 %v666, %v534
      %v682 = vmul.f32 %v668, %v535
      %v683 = vadd.f32 %v679, %v681
      %v684 = vadd.f32 %v680, %v682
      %v685 = vpack.c.bf16 %v684, %v683
      %v687 = vunpack.c.l.b16 %v685
      %v688 = vunpack.c.h.b16 %v685
      %v689 = vpack.c.b16 %v687, %v687
      %v690 = vpack.c.b16 %v688, %v688
      %s693 = scalar_lea.vmem %s218, 8
      %694 = vst [vmem:[%s693] sm:$0xf] %v689
      %695 = vst [vmem:[%s693 + $0x4] sm:$0xf] %v690
      %s696 = scalar_lea.vmem %s206, 48
      %v697 = vld [vmem:[%s696] sm:$0xff]
      %v698 = vld [vmem:[%s696 + $0x8] sm:$0xf]
      %v699 = vld [vmem:[%s696 + $0xc] sm:$0xff]
      %v700 = vld [vmem:[%s696 + $0x14] sm:$0xf]
      %v701 = vunpack.c.l.bf16 %v697
      %v702 = vunpack.c.h.bf16 %v697
      %v703 = vunpack.c.l.bf16 %v698
      %v704 = vunpack.c.l.bf16 %v699
      %v705 = vunpack.c.h.bf16 %v699
      %v706 = vunpack.c.l.bf16 %v700
      %707 = vmatprep.subr.bf16.mxu0 %v382
      %708 = vmatpush1.bf16.msra.mxu0 %v381
      %709 = vmatprep.subr.bf16.mxu0 %v379
      %710 = vmatpush1.bf16.msra.mxu0 %v378
      %711 = vmatprep.subr.bf16.mxu0 %v376
      %712 = vmatpush1.bf16.msra.mxu0 %v375
      %713 = vmatprep.subr.bf16.mxu0 %v373
      %714 = vmatpush1.bf16.msra.mxu0 %v372
      %715 = vmatprep.subr.bf16.mxu0 %v370
      %716 = vmatpush1.bf16.msra.mxu0 %v369
      %717 = vmatprep.subr.bf16.mxu0 %v367
      %718 = vmatpush1.bf16.msra.mxu0 %v366
      %719 = vmatprep.subr.bf16.mxu0 %v364
      %720 = vmatpush1.bf16.msra.mxu0 %v363
      %721 = vmatprep.subr.bf16.mxu0 %v361
      %722 = vmatpush1.bf16.msra.mxu0 %v360
      %723 = vmatprep.subr.bf16.mxu0 0
      %724 = vmatpush2.bf16.msra.mxu0 0
      %725 = vmatprep.subr.bf16.mxu0 0
      %726 = vmatpush2.bf16.msra.mxu0 0
      %727 = vmatprep.subr.bf16.mxu0 0
      %728 = vmatpush2.bf16.msra.mxu0 0
      %729 = vmatprep.subr.bf16.mxu0 0
      %730 = vmatpush2.bf16.msra.mxu0 0
      %731 = vmatprep.subr.bf16.mxu0 0
      %732 = vmatpush2.bf16.msra.mxu0 0
      %733 = vmatprep.subr.bf16.mxu0 0
      %734 = vmatpush2.bf16.msra.mxu0 0
      %735 = vmatprep.subr.bf16.mxu0 0
      %736 = vmatpush2.bf16.msra.mxu0 0
      %737 = vmatprep.subr.bf16.mxu0 0
      %738 = vmatpush2.bf16.msra.mxu0 0
      %739 = vmatprep.mubr.bf16.mxu0 0
      %740 = vmatmul.mubr.bf16.gmra.mxu0 %v685
      %v741 = vpop.f32.mrf.mxu0
      %v742 = vadd.f32 0.0, %v741
      %v743 = vpop.f32.mrf.mxu0
      %v744 = vadd.f32 0.0, %v743
      %v745 = vpop.f32.mrf.mxu0
      %v746 = vadd.f32 0.0, %v745
      %v747 = vpop.f32.mrf.mxu0
      %v748 = vadd.f32 0.0, %v747
      %749 = vdwg.mxu0
      %750 = vmatprep.subr.bf16.mxu0 0
      %751 = vmatpush1.bf16.msra.mxu0 %v383
      %752 = vmatprep.subr.bf16.mxu0 0
      %753 = vmatpush1.bf16.msra.mxu0 %v380
      %754 = vmatprep.subr.bf16.mxu0 0
      %755 = vmatpush1.bf16.msra.mxu0 %v377
      %756 = vmatprep.subr.bf16.mxu0 0
      %757 = vmatpush1.bf16.msra.mxu0 %v374
      %758 = vmatprep.subr.bf16.mxu0 0
      %759 = vmatpush1.bf16.msra.mxu0 %v371
      %760 = vmatprep.subr.bf16.mxu0 0
      %761 = vmatpush1.bf16.msra.mxu0 %v368
      %762 = vmatprep.subr.bf16.mxu0 0
      %763 = vmatpush1.bf16.msra.mxu0 %v365
      %764 = vmatprep.subr.bf16.mxu0 0
      %765 = vmatpush1.bf16.msra.mxu0 %v362
      %766 = vmatprep.subr.bf16.mxu0 0
      %767 = vmatpush2.bf16.msra.mxu0 0
      %768 = vmatprep.subr.bf16.mxu0 0
      %769 = vmatpush2.bf16.msra.mxu0 0
      %770 = vmatprep.subr.bf16.mxu0 0
      %771 = vmatpush2.bf16.msra.mxu0 0
      %772 = vmatprep.subr.bf16.mxu0 0
      %773 = vmatpush2.bf16.msra.mxu0 0
      %774 = vmatprep.subr.bf16.mxu0 0
      %775 = vmatpush2.bf16.msra.mxu0 0
      %776 = vmatprep.subr.bf16.mxu0 0
      %777 = vmatpush2.bf16.msra.mxu0 0
      %778 = vmatprep.subr.bf16.mxu0 0
      %779 = vmatpush2.bf16.msra.mxu0 0
      %780 = vmatprep.subr.bf16.mxu0 0
      %781 = vmatpush2.bf16.msra.mxu0 0
      %782 = vmatprep.mubr.bf16.mxu0 0
      %783 = vmatmul.mubr.bf16.gmra.mxu0 %v685
      %v784 = vpop.f32.mrf.mxu0
      %v785 = vadd.f32 0.0, %v784
      %v786 = vpop.f32.mrf.mxu0
      %v787 = vpop.f32.mrf.mxu0
      %v788 = vadd.f32 0.0, %v787
      %v789 = vpop.f32.mrf.mxu0
      %790 = vdwg.mxu0
      %v791 = vadd.f32 %v701, %v742
      %v792 = vadd.f32 %v704, %v746
      %v793 = vxor.u32 %v791, 2147483648
      %v794 = vxor.u32 %v792, 2147483648
      %v795 = vmul.f32 %v793, 1.442695
      %v796 = vpow.pop %v795
      %v797 = vmul.f32 %v794, 1.442695
      %v798 = vpow.pop %v797
      %v799 = vadd.f32 %v796, 1.0
      %v800 = vadd.f32 %v798, 1.0
      %v801 = vrcp.pop %v799
      %v802 = vmul.f32 1.0, %v801
      %v803 = vrcp.pop %v800
      %v804 = vmul.f32 1.0, %v803
      %v805 = vadd.f32 %v702, %v744
      %v806 = vadd.f32 %v705, %v748
      %v807 = vxor.u32 %v805, 2147483648
      %v808 = vxor.u32 %v806, 2147483648
      %v809 = vmul.f32 %v807, 1.442695
      %v810 = vpow.pop %v809
      %v811 = vmul.f32 %v808, 1.442695
      %v812 = vpow.pop %v811
      %v813 = vadd.f32 %v810, 1.0
      %v814 = vadd.f32 %v812, 1.0
      %v815 = vrcp.pop %v813
      %v816 = vmul.f32 1.0, %v815
      %v817 = vrcp.pop %v814
      %v818 = vmul.f32 1.0, %v817
      %v819 = vadd.f32 %v785, %v265
      %v820 = vadd.f32 %v788, %v265
      %v821 = vmul.f32 %v802, %v819
      %v822 = vmul.f32 %v804, %v820
      %v823 = vadd.f32 %v703, %v821
      %v824 = vadd.f32 %v706, %v822
      %v825 = vtanh.pop %v823
      %v826 = vtanh.pop %v824
      %v827 = vsub.f32 1.0, %v816
      %v828 = vsub.f32 1.0, %v818
      %v829 = vmul.f32 %v827, %v825
      %v830 = vmul.f32 %v828, %v826
      %v831 = vmul.f32 %v816, %v683
      %v832 = vmul.f32 %v818, %v684
      %v833 = vadd.f32 %v829, %v831
      %v834 = vadd.f32 %v830, %v832
      %v835 = vpack.c.bf16 %v834, %v833
      %v837 = vunpack.c.l.b16 %v835
      %v838 = vunpack.c.h.b16 %v835
      %v839 = vpack.c.b16 %v837, %v837
      %v840 = vpack.c.b16 %v838, %v838
      %s843 = scalar_lea.vmem %s218, 16
      %844 = vst [vmem:[%s843] sm:$0xf] %v839
      %845 = vst [vmem:[%s843 + $0x4] sm:$0xf] %v840
      %s846 = scalar_lea.vmem %s206, 72
      %v847 = vld [vmem:[%s846] sm:$0xff]
      %v848 = vld [vmem:[%s846 + $0x8] sm:$0xf]
      %v849 = vld [vmem:[%s846 + $0xc] sm:$0xff]
      %v850 = vld [vmem:[%s846 + $0x14] sm:$0xf]
      %v851 = vunpack.c.l.bf16 %v847
      %v852 = vunpack.c.h.bf16 %v847
      %v853 = vunpack.c.l.bf16 %v848
      %v854 = vunpack.c.l.bf16 %v849
      %v855 = vunpack.c.h.bf16 %v849
      %v856 = vunpack.c.l.bf16 %v850
      %857 = vmatprep.subr.bf16.mxu0 %v382
      %858 = vmatpush1.bf16.msra.mxu0 %v381
      %859 = vmatprep.subr.bf16.mxu0 %v379
      %860 = vmatpush1.bf16.msra.mxu0 %v378
      %861 = vmatprep.subr.bf16.mxu0 %v376
      %862 = vmatpush1.bf16.msra.mxu0 %v375
      %863 = vmatprep.subr.bf16.mxu0 %v373
      %864 = vmatpush1.bf16.msra.mxu0 %v372
      %865 = vmatprep.subr.bf16.mxu0 %v370
      %866 = vmatpush1.bf16.msra.mxu0 %v369
      %867 = vmatprep.subr.bf16.mxu0 %v367
      %868 = vmatpush1.bf16.msra.mxu0 %v366
      %869 = vmatprep.subr.bf16.mxu0 %v364
      %870 = vmatpush1.bf16.msra.mxu0 %v363
      %871 = vmatprep.subr.bf16.mxu0 %v361
      %872 = vmatpush1.bf16.msra.mxu0 %v360
      %873 = vmatprep.subr.bf16.mxu0 0
      %874 = vmatpush2.bf16.msra.mxu0 0
      %875 = vmatprep.subr.bf16.mxu0 0
      %876 = vmatpush2.bf16.msra.mxu0 0
      %877 = vmatprep.subr.bf16.mxu0 0
      %878 = vmatpush2.bf16.msra.mxu0 0
      %879 = vmatprep.subr.bf16.mxu0 0
      %880 = vmatpush2.bf16.msra.mxu0 0
      %881 = vmatprep.subr.bf16.mxu0 0
      %882 = vmatpush2.bf16.msra.mxu0 0
      %883 = vmatprep.subr.bf16.mxu0 0
      %884 = vmatpush2.bf16.msra.mxu0 0
      %885 = vmatprep.subr.bf16.mxu0 0
      %886 = vmatpush2.bf16.msra.mxu0 0
      %887 = vmatprep.subr.bf16.mxu0 0
      %888 = vmatpush2.bf16.msra.mxu0 0
      %889 = vmatprep.mubr.bf16.mxu0 0
      %890 = vmatmul.mubr.bf16.gmra.mxu0 %v835
      %v891 = vpop.f32.mrf.mxu0
      %v892 = vadd.f32 0.0, %v891
      %v893 = vpop.f32.mrf.mxu0
      %v894 = vadd.f32 0.0, %v893
      %v895 = vpop.f32.mrf.mxu0
      %v896 = vadd.f32 0.0, %v895
      %v897 = vpop.f32.mrf.mxu0
      %v898 = vadd.f32 0.0, %v897
      %899 = vdwg.mxu0
      %900 = vmatprep.subr.bf16.mxu0 0
      %901 = vmatpush1.bf16.msra.mxu0 %v383
      %902 = vmatprep.subr.bf16.mxu0 0
      %903 = vmatpush1.bf16.msra.mxu0 %v380
      %904 = vmatprep.subr.bf16.mxu0 0
      %905 = vmatpush1.bf16.msra.mxu0 %v377
      %906 = vmatprep.subr.bf16.mxu0 0
      %907 = vmatpush1.bf16.msra.mxu0 %v374
      %908 = vmatprep.subr.bf16.mxu0 0
      %909 = vmatpush1.bf16.msra.mxu0 %v371
      %910 = vmatprep.subr.bf16.mxu0 0
      %911 = vmatpush1.bf16.msra.mxu0 %v368
      %912 = vmatprep.subr.bf16.mxu0 0
      %913 = vmatpush1.bf16.msra.mxu0 %v365
      %914 = vmatprep.subr.bf16.mxu0 0
      %915 = vmatpush1.bf16.msra.mxu0 %v362
      %916 = vmatprep.subr.bf16.mxu0 0
      %917 = vmatpush2.bf16.msra.mxu0 0
      %918 = vmatprep.subr.bf16.mxu0 0
      %919 = vmatpush2.bf16.msra.mxu0 0
      %920 = vmatprep.subr.bf16.mxu0 0
      %921 = vmatpush2.bf16.msra.mxu0 0
      %922 = vmatprep.subr.bf16.mxu0 0
      %923 = vmatpush2.bf16.msra.mxu0 0
      %924 = vmatprep.subr.bf16.mxu0 0
      %925 = vmatpush2.bf16.msra.mxu0 0
      %926 = vmatprep.subr.bf16.mxu0 0
      %927 = vmatpush2.bf16.msra.mxu0 0
      %928 = vmatprep.subr.bf16.mxu0 0
      %929 = vmatpush2.bf16.msra.mxu0 0
      %930 = vmatprep.subr.bf16.mxu0 0
      %931 = vmatpush2.bf16.msra.mxu0 0
      %932 = vmatprep.mubr.bf16.mxu0 0
      %933 = vmatmul.mubr.bf16.gmra.mxu0 %v835
      %v934 = vpop.f32.mrf.mxu0
      %v935 = vadd.f32 0.0, %v934
      %v936 = vpop.f32.mrf.mxu0
      %v937 = vpop.f32.mrf.mxu0
      %v938 = vadd.f32 0.0, %v937
      %v939 = vpop.f32.mrf.mxu0
      %940 = vdwg.mxu0
      %v941 = vadd.f32 %v851, %v892
      %v942 = vadd.f32 %v854, %v896
      %v943 = vxor.u32 %v941, 2147483648
      %v944 = vxor.u32 %v942, 2147483648
      %v945 = vmul.f32 %v943, 1.442695
      %v946 = vpow.pop %v945
      %v947 = vmul.f32 %v944, 1.442695
      %v948 = vpow.pop %v947
      %v949 = vadd.f32 %v946, 1.0
      %v950 = vadd.f32 %v948, 1.0
      %v951 = vrcp.pop %v949
      %v952 = vmul.f32 1.0, %v951
      %v953 = vrcp.pop %v950
      %v954 = vmul.f32 1.0, %v953
      %v955 = vadd.f32 %v852, %v894
      %v956 = vadd.f32 %v855, %v898
      %v957 = vxor.u32 %v955, 2147483648
      %v958 = vxor.u32 %v956, 2147483648
      %v959 = vmul.f32 %v957, 1.442695
      %v960 = vpow.pop %v959
      %v961 = vmul.f32 %v958, 1.442695
      %v962 = vpow.pop %v961
      %v963 = vadd.f32 %v960, 1.0
      %v964 = vadd.f32 %v962, 1.0
      %v965 = vrcp.pop %v963
      %v966 = vmul.f32 1.0, %v965
      %v967 = vrcp.pop %v964
      %v968 = vmul.f32 1.0, %v967
      %v969 = vadd.f32 %v935, %v265
      %v970 = vadd.f32 %v938, %v265
      %v971 = vmul.f32 %v952, %v969
      %v972 = vmul.f32 %v954, %v970
      %v973 = vadd.f32 %v853, %v971
      %v974 = vadd.f32 %v856, %v972
      %v975 = vtanh.pop %v973
      %v976 = vtanh.pop %v974
      %v977 = vsub.f32 1.0, %v966
      %v978 = vsub.f32 1.0, %v968
      %v979 = vmul.f32 %v977, %v975
      %v980 = vmul.f32 %v978, %v976
      %v981 = vmul.f32 %v966, %v833
      %v982 = vmul.f32 %v968, %v834
      %v983 = vadd.f32 %v979, %v981
      %v984 = vadd.f32 %v980, %v982
      %v985 = vpack.c.bf16 %v984, %v983
      %v987 = vunpack.c.l.b16 %v985
      %v988 = vunpack.c.h.b16 %v985
      %v989 = vpack.c.b16 %v987, %v987
      %v990 = vpack.c.b16 %v988, %v988
      %s993 = scalar_lea.vmem %s218, 24
      %994 = vst [vmem:[%s993] sm:$0xf] %v989
      %995 = vst [vmem:[%s993 + $0x4] sm:$0xf] %v990
      %996 = vst [vmem:[#allocation2] sm:$0xff] %v983
      %997 = vst [vmem:[#allocation2 + $0x8] sm:$0xff] %v984
      %s998 = smul.u32 4, %s19
      %s999 = smul.u32 2, %s18
      %p1000 = scmp.lt.s32.totalorder %s998, 7
      %s1001 = scalar_select %p1000, %s998, 7
      %p1002 = scmp.lt.s32.totalorder %s999, 1
      %s1003 = scalar_select %p1002, %s999, 1
      %s1004 = smul.addr %s1001, 2
      %s1005 = sadd.s32 %s1003, %s1004
      %s1006 = smul.addr %s1005, 4
      %s1007 = scalar_lea.vmem %s3, %s1006
      // Predicated region
      $region37: #{_lambda_.4} parent=31 // pred_check
        %p1008 = pneg %p116
      $region38: #{_lambda_.4} parent=31 // pred_check_branch
        %1010 = sbr.rel (%p1008) target = $region40
      $region39: #{_lambda_.4} parent=31 // pred_region
        %s1011 = smul.u32 4, %s19
        %s1012 = smul.u32 2, %s18
      $region40: #{_lambda_.4} parent=31 // pred_fallthru
        _
    $region32: #{_lambda_.4} parent=5 // pred_fallthru
      _
    %p1013 = scmp.le.s32.totalorder 2, %s9
    // Predicated region
    $region41: #{_lambda_.4} parent=5 // pred_check
      %p1014 = pneg %p1013
    $region42: #{_lambda_.4} parent=5 // pred_check_branch
      %1016 = sbr.rel (%p1014) target = $region44
    $region43: #{_lambda_.4} parent=5 // pred_region
      %s1017 = ssub.s32 %s9, 2
      // Predicated region
      $region45: #{_lambda_.4} parent=43 // pred_check
        %p1018 = pneg %p122
      $region46: #{_lambda_.4} parent=43 // pred_check_branch
        %1020 = sbr.rel (%p1018) target = $region48
      $region47: #{_lambda_.4} parent=43 // pred_region
        %s1021 = smul.u32 4, %s21
        %s1022 = smul.u32 2, %s20
        %p1023 = scmp.lt.s32.totalorder %s1021, 7
        %s1024 = scalar_select %p1023, %s1021, 7
        %p1025 = scmp.lt.s32.totalorder %s1022, 1
        %s1026 = scalar_select %p1025, %s1022, 1
        %s1027 = smul.addr %s1024, 2
        %s1028 = sadd.s32 %s1026, %s1027
        %s1029 = smul.addr %s1028, 4
        %s1030 = scalar_lea.vmem %s3, %s1029
      $region48: #{_lambda_.4} parent=43 // pred_fallthru
        _
    $region44: #{_lambda_.4} parent=5 // pred_fallthru
      _
  $region6: #{_lambda_.4} parent=0 // loop_footer
    %s13 = sadd.s32 1, %s9
  $region7: #{_lambda_.4} parent=0 // loop_footer_branch
    %8 = sbr.rel target = $region3
  $region8: #{_lambda_.4} parent=0 // loop_exit
    _

</llo_original>
